<compile_context>
chip_gen: v6e
topology: v6e:2x2x1
jax: 0.10.0
libtpu: 0.0.40
codegen_flags: <defaults>
</compile_context>

<pallas_src>
import functools

import jax
import jax.numpy as jnp
import numpy as np
from jax.experimental import pallas as pl
from jax.experimental.pallas import tpu as pltpu


def _round_up(x, m):
    return (x + m - 1) // m * m


def _generative_model_kernel(hidden_size, in_pad, n_layers, *refs):
    """Single-invocation kernel: embedding + 3-layer LSTM step + linear."""
    (tok_ref, emb_ref, h0_ref, c0_ref, w_ref, b_ref, wlin_ref, blin_ref,
     logits_ref, h_out_ref, c_out_ref, xh) = refs

    H = hidden_size
    B = xh.shape[0]
    V = emb_ref.shape[0]

    # --- Embedding lookup: one-hot (built directly in bf16) @ pre-padded table.
    # emb table is pre-padded to in_pad lanes, so x0 is lane-dense (B, in_pad).
    tok = tok_ref[...]                                            # (B, 1) i32
    vocab_iota = jax.lax.broadcasted_iota(jnp.int32, (B, V), 1)
    onehot = (tok == vocab_iota).astype(jnp.bfloat16)             # (B, V) bf16
    x0 = jnp.dot(onehot, emb_ref[...],
                 preferred_element_type=jnp.float32)              # (B, in_pad)
    xh[:, :in_pad] = x0.astype(jnp.bfloat16)

    # --- LSTM layers (unrolled static loop; weights VMEM-resident).
    h_new = None
    for l in range(n_layers):
        # Recurrent half of the fused [x | h_prev] row (bf16, aligned store).
        xh[:, in_pad:] = h0_ref[l].astype(jnp.bfloat16)

        # Single fused gate matmul: bf16 operands, f32 accumulation.
        gates = (jnp.dot(xh[...], w_ref[l],
                         preferred_element_type=jnp.float32)
                 + b_ref[l])                                      # (B, 4H) f32

        # PyTorch gate ordering: input, forget, cell(g), output.
        i_g = jax.nn.sigmoid(gates[:, 0 * H:1 * H])
        f_g = jax.nn.sigmoid(gates[:, 1 * H:2 * H])
        g_g = jnp.tanh(gates[:, 2 * H:3 * H])
        o_g = jax.nn.sigmoid(gates[:, 3 * H:4 * H])

        c_new = f_g * c0_ref[l] + i_g * g_g
        h_new = o_g * jnp.tanh(c_new)

        h_out_ref[l] = h_new
        c_out_ref[l] = c_new

        if l + 1 < n_layers:
            # Stage next layer's input.  Any stale columns H:in_pad (only when
            # E > H) multiply zero-padded weight rows, so no explicit padding.
            xh[:, :H] = h_new.astype(jnp.bfloat16)

    # --- Output projection on top layer's hidden state (lane-dense padded N).
    logits_ref[...] = (
        jnp.dot(h_new.astype(jnp.bfloat16), wlin_ref[...],
                preferred_element_type=jnp.float32)
        + blin_ref[...])


def pack_params(raw, hidden_size, n_layers):
    """Convert PyTorch-layout f32 weights into kernel-ready fused bf16 tensors."""
    H = hidden_size
    V, E = raw["embedding"].shape
    out = raw["w_lin"].shape[0]
    in_pad = _round_up(max(E, H), 128)
    out_pad = _round_up(out, 128)

    # Embedding table pre-padded to in_pad lanes (lane-dense layer-0 input).
    emb_pad = (jnp.zeros((V, in_pad), jnp.float32)
               .at[:, :E].set(raw["embedding"]).astype(jnp.bfloat16))

    w_cat, b_cat = [], []
    for l in range(n_layers):
        in_dim = E if l == 0 else H
        w_ih = raw[f"w_ih_{l}"].T                     # (in_dim, 4H)
        w_hh = raw[f"w_hh_{l}"].T                     # (H, 4H)
        w_x = jnp.zeros((in_pad, 4 * H), jnp.float32).at[:in_dim].set(w_ih)
        w_cat.append(jnp.concatenate([w_x, w_hh], axis=0))        # (in_pad+H, 4H)
        b_cat.append((raw[f"b_ih_{l}"] + raw[f"b_hh_{l}"]).reshape(1, 4 * H))

    packed = {
        "emb": emb_pad,                                      # (V, in_pad) bf16
        "w_cat": jnp.stack(w_cat).astype(jnp.bfloat16),      # (L, in_pad+H, 4H)
        "b_cat": jnp.stack(b_cat),                           # (L, 1, 4H) f32
        "w_lin": jnp.zeros((H, out_pad), jnp.float32)
                   .at[:, :out].set(raw["w_lin"].T).astype(jnp.bfloat16),
        "b_lin": jnp.zeros((1, out_pad), jnp.float32).at[0, :out].set(raw["b_lin"]),
        "meta": dict(hidden_size=H, emb_dim=E, vocab_size=V, in_pad=in_pad,
                     out_pad=out_pad, output_size=out, n_layers=n_layers),
    }
    return packed


def generative_model_forward(tokens, hidden, packed):
    """Equivalent of generative_model.forward(input, hidden) (eval mode)."""
    h0, c0 = hidden
    meta = packed["meta"]
    H, in_pad, out_pad = meta["hidden_size"], meta["in_pad"], meta["out_pad"]
    n_layers = meta["n_layers"]
    B = tokens.shape[0]

    tokens2d = tokens.reshape(B, 1).astype(jnp.int32)
    kernel = functools.partial(_generative_model_kernel, H, in_pad, n_layers)

    vmem_spec = pl.BlockSpec(memory_space=pltpu.MemorySpace.VMEM)

    logits_pad, h_new, c_new = pl.pallas_call(
        kernel,
        out_shape=(
            jax.ShapeDtypeStruct((B, out_pad), jnp.float32),
            jax.ShapeDtypeStruct((n_layers, B, H), jnp.float32),
            jax.ShapeDtypeStruct((n_layers, B, H), jnp.float32),
        ),
        in_specs=[vmem_spec] * 8,
        out_specs=(vmem_spec, vmem_spec, vmem_spec),
        scratch_shapes=[pltpu.VMEM((B, in_pad + H), jnp.bfloat16)],
        # Donate h0 -> h_out and c0 -> c_out HBM buffers.
        input_output_aliases={2: 1, 3: 2},
    )(tokens2d, packed["emb"], h0, c0, packed["w_cat"], packed["b_cat"],
      packed["w_lin"], packed["b_lin"])

    return logits_pad[:, :meta["output_size"]], (h_new, c_new)


def init_torch_style_params(key, vocabs_size, hidden_size, output_size,
                            embedding_dimension, n_layers):
    """Deterministic synthetic params in the original PyTorch layout (f32)."""
    raw = {}
    keys = jax.random.split(key, 2 + n_layers)
    raw["embedding"] = 0.02 * jax.random.normal(
        keys[0], (vocabs_size, embedding_dimension), dtype=jnp.float32)
    in_dim = embedding_dimension
    for l in range(n_layers):
        k_ih, k_hh, k_bi, k_bh = jax.random.split(keys[1 + l], 4)
        raw[f"w_ih_{l}"] = 0.05 * jax.random.normal(
            k_ih, (4 * hidden_size, in_dim), dtype=jnp.float32)
        raw[f"w_hh_{l}"] = 0.05 * jax.random.normal(
            k_hh, (4 * hidden_size, hidden_size), dtype=jnp.float32)
        raw[f"b_ih_{l}"] = 0.01 * jax.random.normal(
            k_bi, (4 * hidden_size,), dtype=jnp.float32)
        raw[f"b_hh_{l}"] = 0.01 * jax.random.normal(
            k_bh, (4 * hidden_size,), dtype=jnp.float32)
        in_dim = hidden_size
    k_w, k_b = jax.random.split(keys[1 + n_layers], 2)
    raw["w_lin"] = 0.05 * jax.random.normal(
        k_w, (output_size, hidden_size), dtype=jnp.float32)
    raw["b_lin"] = 0.01 * jax.random.normal(
        k_b, (output_size,), dtype=jnp.float32)
    return raw


def init_hidden(n_layers, batch_size, hidden_size):
    h = jnp.zeros((n_layers, batch_size, hidden_size), dtype=jnp.float32)
    c = jnp.zeros((n_layers, batch_size, hidden_size), dtype=jnp.float32)
    return (h, c)


def reference_forward(tokens, hidden, raw, n_layers, hidden_size):
    """Pure-JAX f32 reference matching the PyTorch module (eval mode)."""
    H = hidden_size
    h0, c0 = hidden
    x = raw["embedding"][tokens]
    hs, cs = [], []
    inp = x
    for l in range(n_layers):
        gates = (inp @ raw[f"w_ih_{l}"].T + h0[l] @ raw[f"w_hh_{l}"].T
                 + raw[f"b_ih_{l}"] + raw[f"b_hh_{l}"])
        i_g = jax.nn.sigmoid(gates[:, 0 * H:1 * H])
        f_g = jax.nn.sigmoid(gates[:, 1 * H:2 * H])
        g_g = jnp.tanh(gates[:, 2 * H:3 * H])
        o_g = jax.nn.sigmoid(gates[:, 3 * H:4 * H])
        c = f_g * c0[l] + i_g * g_g
        h = o_g * jnp.tanh(c)
        hs.append(h)
        cs.append(c)
        inp = h
    logits = inp @ raw["w_lin"].T + raw["b_lin"]
    return logits, (jnp.stack(hs), jnp.stack(cs))


if __name__ == "__main__":
    # Small shapes consistent with the module (vocab/emb/hidden/output scaled).
    batch_size = 8
    vocabs_size = 32
    embedding_dimension = 64
    hidden_size = 128
    n_layers = 3
    output_size = vocabs_size

    key = jax.random.PRNGKey(0)
    k_params, k_tokens = jax.random.split(key)

    raw = init_torch_style_params(k_params, vocabs_size, hidden_size,
                                  output_size, embedding_dimension, n_layers)
    packed = pack_params(raw, hidden_size, n_layers)

    tokens = jax.random.randint(k_tokens, (batch_size,), 0, vocabs_size,
                                dtype=jnp.int32)

    # Non-zero hidden state so the recurrent (W_hh) path is exercised.
    _ = init_hidden(n_layers, batch_size, hidden_size)  # module-parity helper
    h0 = 0.1 * jax.random.normal(jax.random.PRNGKey(1),
                                 (n_layers, batch_size, hidden_size),
                                 dtype=jnp.float32)
    c0 = 0.1 * jax.random.normal(jax.random.PRNGKey(2),
                                 (n_layers, batch_size, hidden_size),
                                 dtype=jnp.float32)
    hidden = (h0, c0)

    # Compute the f32 reference BEFORE the kernel (h0/c0 buffers are donated
    # to the kernel outputs via input_output_aliases).
    ref_logits, (ref_h, ref_c) = reference_forward(tokens, hidden, raw,
                                                   n_layers, hidden_size)
    jax.block_until_ready((ref_logits, ref_h, ref_c))

    logits, (h_new, c_new) = generative_model_forward(tokens, hidden, packed)
    jax.block_until_ready((logits, h_new, c_new))

    assert logits.shape == (batch_size, output_size)
    assert h_new.shape == (n_layers, batch_size, hidden_size)
    assert c_new.shape == (n_layers, batch_size, hidden_size)

    # Cross-check against the pure-JAX f32 reference (bf16 weights => loose tol).
    np.testing.assert_allclose(np.asarray(logits), np.asarray(ref_logits),
                               atol=5e-2, rtol=5e-2)
    np.testing.assert_allclose(np.asarray(h_new), np.asarray(ref_h),
                               atol=5e-2, rtol=5e-2)
    np.testing.assert_allclose(np.asarray(c_new), np.asarray(ref_c),
                               atol=5e-2, rtol=5e-2)

    print("KERNEL_OK")
</pallas_src>

<mosaic_0001>
module attributes {stable_mosaic.version = 11 : i64} {
  func.func @_generative_model_kernel(%arg0: memref<8x1xi32, #tpu.memory_space<vmem>>, %arg1: memref<32x128xbf16, #tpu.memory_space<vmem>>, %arg2: memref<3x8x128xf32, #tpu.memory_space<vmem>>, %arg3: memref<3x8x128xf32, #tpu.memory_space<vmem>>, %arg4: memref<3x256x512xbf16, #tpu.memory_space<vmem>>, %arg5: memref<3x1x512xf32, #tpu.memory_space<vmem>>, %arg6: memref<128x128xbf16, #tpu.memory_space<vmem>>, %arg7: memref<1x128xf32, #tpu.memory_space<vmem>>, %arg8: memref<8x128xf32, #tpu.memory_space<vmem>>, %arg9: memref<3x8x128xf32, #tpu.memory_space<vmem>>, %arg10: memref<3x8x128xf32, #tpu.memory_space<vmem>>, %arg11: memref<8x256xbf16, #tpu.memory_space<vmem>>) attributes {dimension_semantics = [], scalar_prefetch = 0 : i64, scratch_operands = 1 : i64, tpu.core_type = #tpu.core_type<tc>} {
    %c0 = arith.constant 0 : index
    %c0_0 = arith.constant 0 : index
    %0 = vector.load %arg0[%c0, %c0_0] : memref<8x1xi32, #tpu.memory_space<vmem>>, vector<8x1xi32>
    %1 = tpu.iota {dimensions = array<i32: 1>} : vector<8x32xi32>
    %2 = vector.broadcast %0 : vector<8x1xi32> to vector<8x32xi32>
    %3 = arith.cmpi eq, %2, %1 : vector<8x32xi32>
    %4 = arith.extui %3 : vector<8x32xi1> to vector<8x32xi32>
    %5 = arith.sitofp %4 : vector<8x32xi32> to vector<8x32xf32>
    %6 = arith.truncf %5 : vector<8x32xf32> to vector<8x32xbf16>
    %c0_1 = arith.constant 0 : index
    %c0_2 = arith.constant 0 : index
    %7 = vector.load %arg1[%c0_1, %c0_2] : memref<32x128xbf16, #tpu.memory_space<vmem>>, vector<32x128xbf16>
    %cst = arith.constant dense<0.000000e+00> : vector<8x128xf32>
    %8 = tpu.matmul %6, %7, %cst {dimension_numbers = #tpu.dot_dimension_numbers<[1], [0], [0], [1], [0, 0, 1, 1], [], []>} : vector<8x32xbf16>, vector<32x128xbf16>, vector<8x128xf32> -> vector<8x128xf32>
    %9 = arith.truncf %8 : vector<8x128xf32> to vector<8x128xbf16>
    %c0_3 = arith.constant 0 : index
    %c0_4 = arith.constant 0 : index
    %10 = vector.load %arg11[%c0_3, %c0_4] : memref<8x256xbf16, #tpu.memory_space<vmem>>, vector<8x128xbf16>
    tpu.vector_store %arg11[%c0_3, %c0_4], %9 {strides = array<i32>} : memref<8x256xbf16, #tpu.memory_space<vmem>>, vector<8x128xbf16>,
    %c0_5 = arith.constant 0 : index
    %c0_6 = arith.constant 0 : index
    %c0_7 = arith.constant 0 : index
    %11 = vector.load %arg2[%c0_5, %c0_6, %c0_7] : memref<3x8x128xf32, #tpu.memory_space<vmem>>, vector<1x8x128xf32>
    %12 = vector.shape_cast %11 : vector<1x8x128xf32> to vector<8x128xf32>
    %13 = arith.truncf %12 : vector<8x128xf32> to vector<8x128xbf16>
    %c0_8 = arith.constant 0 : index
    %c128 = arith.constant 128 : index
    %14 = vector.load %arg11[%c0_8, %c128] : memref<8x256xbf16, #tpu.memory_space<vmem>>, vector<8x128xbf16>
    tpu.vector_store %arg11[%c0_8, %c128], %13 {strides = array<i32>} : memref<8x256xbf16, #tpu.memory_space<vmem>>, vector<8x128xbf16>,
    %c0_9 = arith.constant 0 : index
    %c0_10 = arith.constant 0 : index
    %15 = vector.load %arg11[%c0_9, %c0_10] : memref<8x256xbf16, #tpu.memory_space<vmem>>, vector<8x256xbf16>
    %c0_11 = arith.constant 0 : index
    %c0_12 = arith.constant 0 : index
    %c0_13 = arith.constant 0 : index
    %16 = vector.load %arg4[%c0_11, %c0_12, %c0_13] : memref<3x256x512xbf16, #tpu.memory_space<vmem>>, vector<1x256x512xbf16>
    %17 = vector.shape_cast %16 : vector<1x256x512xbf16> to vector<256x512xbf16>
    %cst_14 = arith.constant dense<0.000000e+00> : vector<8x512xf32>
    %18 = tpu.matmul %15, %17, %cst_14 {dimension_numbers = #tpu.dot_dimension_numbers<[1], [0], [0], [1], [0, 0, 1, 1], [], []>} : vector<8x256xbf16>, vector<256x512xbf16>, vector<8x512xf32> -> vector<8x512xf32>
    %c0_15 = arith.constant 0 : index
    %c0_16 = arith.constant 0 : index
    %c0_17 = arith.constant 0 : index
    %19 = vector.load %arg5[%c0_15, %c0_16, %c0_17] : memref<3x1x512xf32, #tpu.memory_space<vmem>>, vector<1x1x512xf32>
    %20 = vector.shape_cast %19 : vector<1x1x512xf32> to vector<1x512xf32>
    %21 = vector.broadcast %20 : vector<1x512xf32> to vector<8x512xf32>
    %22 = arith.addf %18, %21 : vector<8x512xf32>
    %23 = vector.extract_strided_slice %22 {offsets = [0, 0], sizes = [8, 128], strides = [1, 1]} : vector<8x512xf32> to vector<8x128xf32>
    %24 = arith.negf %23 : vector<8x128xf32>
    %25 = math.exp %24 : vector<8x128xf32>
    %cst_18 = arith.constant 1.000000e+00 : f32
    %26 = vector.broadcast %cst_18 : f32 to vector<8x128xf32>
    %27 = arith.addf %26, %25 : vector<8x128xf32>
    %28 = arith.divf %26, %27 : vector<8x128xf32>
    %29 = vector.extract_strided_slice %22 {offsets = [0, 128], sizes = [8, 128], strides = [1, 1]} : vector<8x512xf32> to vector<8x128xf32>
    %30 = arith.negf %29 : vector<8x128xf32>
    %31 = math.exp %30 : vector<8x128xf32>
    %cst_19 = arith.constant 1.000000e+00 : f32
    %32 = vector.broadcast %cst_19 : f32 to vector<8x128xf32>
    %33 = arith.addf %32, %31 : vector<8x128xf32>
    %34 = arith.divf %32, %33 : vector<8x128xf32>
    %35 = vector.extract_strided_slice %22 {offsets = [0, 256], sizes = [8, 128], strides = [1, 1]} : vector<8x512xf32> to vector<8x128xf32>
    %36 = math.tanh %35 : vector<8x128xf32>
    %37 = vector.extract_strided_slice %22 {offsets = [0, 384], sizes = [8, 128], strides = [1, 1]} : vector<8x512xf32> to vector<8x128xf32>
    %38 = arith.negf %37 : vector<8x128xf32>
    %39 = math.exp %38 : vector<8x128xf32>
    %cst_20 = arith.constant 1.000000e+00 : f32
    %40 = vector.broadcast %cst_20 : f32 to vector<8x128xf32>
    %41 = arith.addf %40, %39 : vector<8x128xf32>
    %42 = arith.divf %40, %41 : vector<8x128xf32>
    %c0_21 = arith.constant 0 : index
    %c0_22 = arith.constant 0 : index
    %c0_23 = arith.constant 0 : index
    %43 = vector.load %arg3[%c0_21, %c0_22, %c0_23] : memref<3x8x128xf32, #tpu.memory_space<vmem>>, vector<1x8x128xf32>
    %44 = vector.shape_cast %43 : vector<1x8x128xf32> to vector<8x128xf32>
    %45 = arith.mulf %34, %44 : vector<8x128xf32>
    %46 = arith.mulf %28, %36 : vector<8x128xf32>
    %47 = arith.addf %45, %46 : vector<8x128xf32>
    %48 = math.tanh %47 : vector<8x128xf32>
    %49 = arith.mulf %42, %48 : vector<8x128xf32>
    %c0_24 = arith.constant 0 : index
    %c0_25 = arith.constant 0 : index
    %c0_26 = arith.constant 0 : index
    %50 = vector.load %arg9[%c0_24, %c0_25, %c0_26] : memref<3x8x128xf32, #tpu.memory_space<vmem>>, vector<1x8x128xf32>
    %51 = vector.shape_cast %50 : vector<1x8x128xf32> to vector<8x128xf32>
    %52 = vector.shape_cast %49 : vector<8x128xf32> to vector<1x8x128xf32>
    tpu.vector_store %arg9[%c0_24, %c0_25, %c0_26], %52 {strides = array<i32>} : memref<3x8x128xf32, #tpu.memory_space<vmem>>, vector<1x8x128xf32>,
    %c0_27 = arith.constant 0 : index
    %c0_28 = arith.constant 0 : index
    %c0_29 = arith.constant 0 : index
    %53 = vector.load %arg10[%c0_27, %c0_28, %c0_29] : memref<3x8x128xf32, #tpu.memory_space<vmem>>, vector<1x8x128xf32>
    %54 = vector.shape_cast %53 : vector<1x8x128xf32> to vector<8x128xf32>
    %55 = vector.shape_cast %47 : vector<8x128xf32> to vector<1x8x128xf32>
    tpu.vector_store %arg10[%c0_27, %c0_28, %c0_29], %55 {strides = array<i32>} : memref<3x8x128xf32, #tpu.memory_space<vmem>>, vector<1x8x128xf32>,
    %56 = arith.truncf %49 : vector<8x128xf32> to vector<8x128xbf16>
    %c0_30 = arith.constant 0 : index
    %c0_31 = arith.constant 0 : index
    %57 = vector.load %arg11[%c0_30, %c0_31] : memref<8x256xbf16, #tpu.memory_space<vmem>>, vector<8x128xbf16>
    tpu.vector_store %arg11[%c0_30, %c0_31], %56 {strides = array<i32>} : memref<8x256xbf16, #tpu.memory_space<vmem>>, vector<8x128xbf16>,
    %c1 = arith.constant 1 : index
    %c0_32 = arith.constant 0 : index
    %c0_33 = arith.constant 0 : index
    %58 = vector.load %arg2[%c1, %c0_32, %c0_33] : memref<3x8x128xf32, #tpu.memory_space<vmem>>, vector<1x8x128xf32>
    %59 = vector.shape_cast %58 : vector<1x8x128xf32> to vector<8x128xf32>
    %60 = arith.truncf %59 : vector<8x128xf32> to vector<8x128xbf16>
    %c0_34 = arith.constant 0 : index
    %c128_35 = arith.constant 128 : index
    %61 = vector.load %arg11[%c0_34, %c128_35] : memref<8x256xbf16, #tpu.memory_space<vmem>>, vector<8x128xbf16>
    tpu.vector_store %arg11[%c0_34, %c128_35], %60 {strides = array<i32>} : memref<8x256xbf16, #tpu.memory_space<vmem>>, vector<8x128xbf16>,
    %c0_36 = arith.constant 0 : index
    %c0_37 = arith.constant 0 : index
    %62 = vector.load %arg11[%c0_36, %c0_37] : memref<8x256xbf16, #tpu.memory_space<vmem>>, vector<8x256xbf16>
    %c1_38 = arith.constant 1 : index
    %c0_39 = arith.constant 0 : index
    %c0_40 = arith.constant 0 : index
    %63 = vector.load %arg4[%c1_38, %c0_39, %c0_40] : memref<3x256x512xbf16, #tpu.memory_space<vmem>>, vector<1x256x512xbf16>
    %64 = vector.shape_cast %63 : vector<1x256x512xbf16> to vector<256x512xbf16>
    %cst_41 = arith.constant dense<0.000000e+00> : vector<8x512xf32>
    %65 = tpu.matmul %62, %64, %cst_41 {dimension_numbers = #tpu.dot_dimension_numbers<[1], [0], [0], [1], [0, 0, 1, 1], [], []>} : vector<8x256xbf16>, vector<256x512xbf16>, vector<8x512xf32> -> vector<8x512xf32>
    %c1_42 = arith.constant 1 : index
    %c0_43 = arith.constant 0 : index
    %c0_44 = arith.constant 0 : index
    %66 = vector.load %arg5[%c1_42, %c0_43, %c0_44] : memref<3x1x512xf32, #tpu.memory_space<vmem>>, vector<1x1x512xf32>
    %67 = vector.shape_cast %66 : vector<1x1x512xf32> to vector<1x512xf32>
    %68 = vector.broadcast %67 : vector<1x512xf32> to vector<8x512xf32>
    %69 = arith.addf %65, %68 : vector<8x512xf32>
    %70 = vector.extract_strided_slice %69 {offsets = [0, 0], sizes = [8, 128], strides = [1, 1]} : vector<8x512xf32> to vector<8x128xf32>
    %71 = arith.negf %70 : vector<8x128xf32>
    %72 = math.exp %71 : vector<8x128xf32>
    %cst_45 = arith.constant 1.000000e+00 : f32
    %73 = vector.broadcast %cst_45 : f32 to vector<8x128xf32>
    %74 = arith.addf %73, %72 : vector<8x128xf32>
    %75 = arith.divf %73, %74 : vector<8x128xf32>
    %76 = vector.extract_strided_slice %69 {offsets = [0, 128], sizes = [8, 128], strides = [1, 1]} : vector<8x512xf32> to vector<8x128xf32>
    %77 = arith.negf %76 : vector<8x128xf32>
    %78 = math.exp %77 : vector<8x128xf32>
    %cst_46 = arith.constant 1.000000e+00 : f32
    %79 = vector.broadcast %cst_46 : f32 to vector<8x128xf32>
    %80 = arith.addf %79, %78 : vector<8x128xf32>
    %81 = arith.divf %79, %80 : vector<8x128xf32>
    %82 = vector.extract_strided_slice %69 {offsets = [0, 256], sizes = [8, 128], strides = [1, 1]} : vector<8x512xf32> to vector<8x128xf32>
    %83 = math.tanh %82 : vector<8x128xf32>
    %84 = vector.extract_strided_slice %69 {offsets = [0, 384], sizes = [8, 128], strides = [1, 1]} : vector<8x512xf32> to vector<8x128xf32>
    %85 = arith.negf %84 : vector<8x128xf32>
    %86 = math.exp %85 : vector<8x128xf32>
    %cst_47 = arith.constant 1.000000e+00 : f32
    %87 = vector.broadcast %cst_47 : f32 to vector<8x128xf32>
    %88 = arith.addf %87, %86 : vector<8x128xf32>
    %89 = arith.divf %87, %88 : vector<8x128xf32>
    %c1_48 = arith.constant 1 : index
    %c0_49 = arith.constant 0 : index
    %c0_50 = arith.constant 0 : index
    %90 = vector.load %arg3[%c1_48, %c0_49, %c0_50] : memref<3x8x128xf32, #tpu.memory_space<vmem>>, vector<1x8x128xf32>
    %91 = vector.shape_cast %90 : vector<1x8x128xf32> to vector<8x128xf32>
    %92 = arith.mulf %81, %91 : vector<8x128xf32>
    %93 = arith.mulf %75, %83 : vector<8x128xf32>
    %94 = arith.addf %92, %93 : vector<8x128xf32>
    %95 = math.tanh %94 : vector<8x128xf32>
    %96 = arith.mulf %89, %95 : vector<8x128xf32>
    %c1_51 = arith.constant 1 : index
    %c0_52 = arith.constant 0 : index
    %c0_53 = arith.constant 0 : index
    %97 = vector.load %arg9[%c1_51, %c0_52, %c0_53] : memref<3x8x128xf32, #tpu.memory_space<vmem>>, vector<1x8x128xf32>
    %98 = vector.shape_cast %97 : vector<1x8x128xf32> to vector<8x128xf32>
    %99 = vector.shape_cast %96 : vector<8x128xf32> to vector<1x8x128xf32>
    tpu.vector_store %arg9[%c1_51, %c0_52, %c0_53], %99 {strides = array<i32>} : memref<3x8x128xf32, #tpu.memory_space<vmem>>, vector<1x8x128xf32>,
    %c1_54 = arith.constant 1 : index
    %c0_55 = arith.constant 0 : index
    %c0_56 = arith.constant 0 : index
    %100 = vector.load %arg10[%c1_54, %c0_55, %c0_56] : memref<3x8x128xf32, #tpu.memory_space<vmem>>, vector<1x8x128xf32>
    %101 = vector.shape_cast %100 : vector<1x8x128xf32> to vector<8x128xf32>
    %102 = vector.shape_cast %94 : vector<8x128xf32> to vector<1x8x128xf32>
    tpu.vector_store %arg10[%c1_54, %c0_55, %c0_56], %102 {strides = array<i32>} : memref<3x8x128xf32, #tpu.memory_space<vmem>>, vector<1x8x128xf32>,
    %103 = arith.truncf %96 : vector<8x128xf32> to vector<8x128xbf16>
    %c0_57 = arith.constant 0 : index
    %c0_58 = arith.constant 0 : index
    %104 = vector.load %arg11[%c0_57, %c0_58] : memref<8x256xbf16, #tpu.memory_space<vmem>>, vector<8x128xbf16>
    tpu.vector_store %arg11[%c0_57, %c0_58], %103 {strides = array<i32>} : memref<8x256xbf16, #tpu.memory_space<vmem>>, vector<8x128xbf16>,
    %c2 = arith.constant 2 : index
    %c0_59 = arith.constant 0 : index
    %c0_60 = arith.constant 0 : index
    %105 = vector.load %arg2[%c2, %c0_59, %c0_60] : memref<3x8x128xf32, #tpu.memory_space<vmem>>, vector<1x8x128xf32>
    %106 = vector.shape_cast %105 : vector<1x8x128xf32> to vector<8x128xf32>
    %107 = arith.truncf %106 : vector<8x128xf32> to vector<8x128xbf16>
    %c0_61 = arith.constant 0 : index
    %c128_62 = arith.constant 128 : index
    %108 = vector.load %arg11[%c0_61, %c128_62] : memref<8x256xbf16, #tpu.memory_space<vmem>>, vector<8x128xbf16>
    tpu.vector_store %arg11[%c0_61, %c128_62], %107 {strides = array<i32>} : memref<8x256xbf16, #tpu.memory_space<vmem>>, vector<8x128xbf16>,
    %c0_63 = arith.constant 0 : index
    %c0_64 = arith.constant 0 : index
    %109 = vector.load %arg11[%c0_63, %c0_64] : memref<8x256xbf16, #tpu.memory_space<vmem>>, vector<8x256xbf16>
    %c2_65 = arith.constant 2 : index
    %c0_66 = arith.constant 0 : index
    %c0_67 = arith.constant 0 : index
    %110 = vector.load %arg4[%c2_65, %c0_66, %c0_67] : memref<3x256x512xbf16, #tpu.memory_space<vmem>>, vector<1x256x512xbf16>
    %111 = vector.shape_cast %110 : vector<1x256x512xbf16> to vector<256x512xbf16>
    %cst_68 = arith.constant dense<0.000000e+00> : vector<8x512xf32>
    %112 = tpu.matmul %109, %111, %cst_68 {dimension_numbers = #tpu.dot_dimension_numbers<[1], [0], [0], [1], [0, 0, 1, 1], [], []>} : vector<8x256xbf16>, vector<256x512xbf16>, vector<8x512xf32> -> vector<8x512xf32>
    %c2_69 = arith.constant 2 : index
    %c0_70 = arith.constant 0 : index
    %c0_71 = arith.constant 0 : index
    %113 = vector.load %arg5[%c2_69, %c0_70, %c0_71] : memref<3x1x512xf32, #tpu.memory_space<vmem>>, vector<1x1x512xf32>
    %114 = vector.shape_cast %113 : vector<1x1x512xf32> to vector<1x512xf32>
    %115 = vector.broadcast %114 : vector<1x512xf32> to vector<8x512xf32>
    %116 = arith.addf %112, %115 : vector<8x512xf32>
    %117 = vector.extract_strided_slice %116 {offsets = [0, 0], sizes = [8, 128], strides = [1, 1]} : vector<8x512xf32> to vector<8x128xf32>
    %118 = arith.negf %117 : vector<8x128xf32>
    %119 = math.exp %118 : vector<8x128xf32>
    %cst_72 = arith.constant 1.000000e+00 : f32
    %120 = vector.broadcast %cst_72 : f32 to vector<8x128xf32>
    %121 = arith.addf %120, %119 : vector<8x128xf32>
    %122 = arith.divf %120, %121 : vector<8x128xf32>
    %123 = vector.extract_strided_slice %116 {offsets = [0, 128], sizes = [8, 128], strides = [1, 1]} : vector<8x512xf32> to vector<8x128xf32>
    %124 = arith.negf %123 : vector<8x128xf32>
    %125 = math.exp %124 : vector<8x128xf32>
    %cst_73 = arith.constant 1.000000e+00 : f32
    %126 = vector.broadcast %cst_73 : f32 to vector<8x128xf32>
    %127 = arith.addf %126, %125 : vector<8x128xf32>
    %128 = arith.divf %126, %127 : vector<8x128xf32>
    %129 = vector.extract_strided_slice %116 {offsets = [0, 256], sizes = [8, 128], strides = [1, 1]} : vector<8x512xf32> to vector<8x128xf32>
    %130 = math.tanh %129 : vector<8x128xf32>
    %131 = vector.extract_strided_slice %116 {offsets = [0, 384], sizes = [8, 128], strides = [1, 1]} : vector<8x512xf32> to vector<8x128xf32>
    %132 = arith.negf %131 : vector<8x128xf32>
    %133 = math.exp %132 : vector<8x128xf32>
    %cst_74 = arith.constant 1.000000e+00 : f32
    %134 = vector.broadcast %cst_74 : f32 to vector<8x128xf32>
    %135 = arith.addf %134, %133 : vector<8x128xf32>
    %136 = arith.divf %134, %135 : vector<8x128xf32>
    %c2_75 = arith.constant 2 : index
    %c0_76 = arith.constant 0 : index
    %c0_77 = arith.constant 0 : index
    %137 = vector.load %arg3[%c2_75, %c0_76, %c0_77] : memref<3x8x128xf32, #tpu.memory_space<vmem>>, vector<1x8x128xf32>
    %138 = vector.shape_cast %137 : vector<1x8x128xf32> to vector<8x128xf32>
    %139 = arith.mulf %128, %138 : vector<8x128xf32>
    %140 = arith.mulf %122, %130 : vector<8x128xf32>
    %141 = arith.addf %139, %140 : vector<8x128xf32>
    %142 = math.tanh %141 : vector<8x128xf32>
    %143 = arith.mulf %136, %142 : vector<8x128xf32>
    %c2_78 = arith.constant 2 : index
    %c0_79 = arith.constant 0 : index
    %c0_80 = arith.constant 0 : index
    %144 = vector.load %arg9[%c2_78, %c0_79, %c0_80] : memref<3x8x128xf32, #tpu.memory_space<vmem>>, vector<1x8x128xf32>
    %145 = vector.shape_cast %144 : vector<1x8x128xf32> to vector<8x128xf32>
    %146 = vector.shape_cast %143 : vector<8x128xf32> to vector<1x8x128xf32>
    tpu.vector_store %arg9[%c2_78, %c0_79, %c0_80], %146 {strides = array<i32>} : memref<3x8x128xf32, #tpu.memory_space<vmem>>, vector<1x8x128xf32>,
    %c2_81 = arith.constant 2 : index
    %c0_82 = arith.constant 0 : index
    %c0_83 = arith.constant 0 : index
    %147 = vector.load %arg10[%c2_81, %c0_82, %c0_83] : memref<3x8x128xf32, #tpu.memory_space<vmem>>, vector<1x8x128xf32>
    %148 = vector.shape_cast %147 : vector<1x8x128xf32> to vector<8x128xf32>
    %149 = vector.shape_cast %141 : vector<8x128xf32> to vector<1x8x128xf32>
    tpu.vector_store %arg10[%c2_81, %c0_82, %c0_83], %149 {strides = array<i32>} : memref<3x8x128xf32, #tpu.memory_space<vmem>>, vector<1x8x128xf32>,
    %150 = arith.truncf %143 : vector<8x128xf32> to vector<8x128xbf16>
    %c0_84 = arith.constant 0 : index
    %c0_85 = arith.constant 0 : index
    %151 = vector.load %arg6[%c0_84, %c0_85] : memref<128x128xbf16, #tpu.memory_space<vmem>>, vector<128x128xbf16>
    %cst_86 = arith.constant dense<0.000000e+00> : vector<8x128xf32>
    %152 = tpu.matmul %150, %151, %cst_86 {dimension_numbers = #tpu.dot_dimension_numbers<[1], [0], [0], [1], [0, 0, 1, 1], [], []>} : vector<8x128xbf16>, vector<128x128xbf16>, vector<8x128xf32> -> vector<8x128xf32>
    %c0_87 = arith.constant 0 : index
    %c0_88 = arith.constant 0 : index
    %153 = vector.load %arg7[%c0_87, %c0_88] : memref<1x128xf32, #tpu.memory_space<vmem>>, vector<1x128xf32>
    %154 = vector.broadcast %153 : vector<1x128xf32> to vector<8x128xf32>
    %155 = arith.addf %152, %154 : vector<8x128xf32>
    %c0_89 = arith.constant 0 : index
    %c0_90 = arith.constant 0 : index
    %156 = vector.load %arg8[%c0_89, %c0_90] : memref<8x128xf32, #tpu.memory_space<vmem>>, vector<8x128xf32>
    tpu.vector_store %arg8[%c0_89, %c0_90], %155 {strides = array<i32>} : memref<8x128xf32, #tpu.memory_space<vmem>>, vector<8x128xf32>,
    return
  }
}

</mosaic_0001>

<llo_original>
// kernel: tpu_custom_call.1
$region0: #{tpu_custom_call.1}
  #allocation0 [shape = 'u32[]', space=smem, size = 0x4, offset = 0x4, fixed_abs, tag = 'smem constant byte address 0x4 - core index']
  #allocation1 [shape = 'u32[144,128]{1,0:T(1,128)}', space=vmem, size = 0x12000, scoped, tag = 'internal scratch']
  #allocation2 [shape = 'bf16[8,256]{1,0:T(8,128)(2,1)}', space=vmem, size = 0x1000, scoped, tag = 'scratch operand']
  %s0 = inlined_call_operand.vmem [shape: s32[8,1], index: 0, kind: input, shape index: {}]
  %s1 = inlined_call_operand.vmem [shape: bf16[32,128], index: 1, kind: input, shape index: {}]
  %s2 = inlined_call_operand.hbm [shape: f32[3,8,128], index: 2, kind: input, shape index: {}, may-alias: {2,9}]
  %s3 = inlined_call_operand.hbm [shape: f32[3,8,128], index: 3, kind: input, shape index: {}, may-alias: {3,10}]
  %s4 = inlined_call_operand.hbm [shape: bf16[3,256,512], index: 4, kind: input, shape index: {}]
  %s5 = inlined_call_operand.hbm [shape: f32[3,1,512], index: 5, kind: input, shape index: {}]
  %s6 = inlined_call_operand.vmem [shape: bf16[128,128], index: 6, kind: input, shape index: {}]
  %s7 = inlined_call_operand.vmem [shape: f32[1,128], index: 7, kind: input, shape index: {}]
  %s8 = inlined_call_operand.hbm [shape: f32[8,128], index: 8, kind: output, shape index: {0}]
  %s9 = inlined_call_operand.hbm [shape: f32[3,8,128], index: 9, kind: output, shape index: {1}, may-alias: {2,9}]
  %s10 = inlined_call_operand.hbm [shape: f32[3,8,128], index: 10, kind: output, shape index: {2}, may-alias: {3,10}]
  %11 = xla_tuple %s8, %s9, %s10
  %s12 = sld [smem:[#allocation0]]
  $region74: #{tpu_custom_call.1} parent=0
    _
  %s14 = ssub.s32 1, %s12
  %s15 = scalar_select 0, %s14, %s12
  $region1: #{tpu_custom_call.1} parent=0
    #allocation3 [shape = 'u8[12288]{0}', space=vmem, size = 0x3000, scoped, tag = 'input window, operand 2, single buffered']
    #allocation4 [shape = 's32[1]{0}', space=sflag, size = 0x4, scoped, tag = 'scoped memory for tpu_custom_call.1']
    #allocation5 [shape = 's32[1]{0}', space=sflag, size = 0x4, scoped, tag = 'scoped memory for tpu_custom_call.1']
    #allocation6 [shape = 'u8[12288]{0}', space=vmem, size = 0x3000, scoped, tag = 'input window, operand 3, single buffered']
    #allocation7 [shape = 's32[1]{0}', space=sflag, size = 0x4, scoped, tag = 'scoped memory for tpu_custom_call.1']
    #allocation8 [shape = 'u8[786432]{0}', space=vmem, size = 0xc0000, scoped, tag = 'input window, operand 4, single buffered']
    #allocation9 [shape = 'u8[6144]{0}', space=vmem, size = 0x1800, scoped, tag = 'input window, operand 5, single buffered']
    #allocation10 [shape = 's32[1]{0}', space=sflag, size = 0x4, scoped, tag = 'scoped memory for tpu_custom_call.1']
    #allocation11 [shape = 'u8[4096]{0}', space=vmem, size = 0x1000, scoped, tag = 'output window, operand 0, single buffered']
    #allocation12 [shape = 'u8[12288]{0}', space=vmem, size = 0x3000, scoped, tag = 'output window, operand 1, single buffered']
    #allocation13 [shape = 's32[1]{0}', space=sflag, size = 0x4, scoped, tag = 'scoped memory for tpu_custom_call.1']
    #allocation14 [shape = 'u8[12288]{0}', space=vmem, size = 0x3000, scoped, tag = 'output window, operand 2, single buffered']
    %16 = vsyncpa [#allocation4], 0
    %17 = vsyncpa [#allocation7], 0
    %18 = vsyncpa [#allocation10], 0
    %19 = vsyncpa [#allocation5], 0
    %20 = vsyncpa [#allocation13], 0
    // Predicated region
    $region2: #{tpu_custom_call.1} parent=1 // pred_check
      _
    $region3: #{tpu_custom_call.1} parent=1 // pred_check_branch
      %22 = sbr.rel (0) target = $region5
    $region4: #{tpu_custom_call.1} parent=1 // pred_region
      _
    $region5: #{tpu_custom_call.1} parent=1 // pred_fallthru
      _
    // Predicated region
    $region6: #{tpu_custom_call.1} parent=1 // pred_check
      _
    $region7: #{tpu_custom_call.1} parent=1 // pred_check_branch
      %24 = sbr.rel (0) target = $region9
    $region8: #{tpu_custom_call.1} parent=1 // pred_region
      _
    $region9: #{tpu_custom_call.1} parent=1 // pred_fallthru
      _
    // Predicated region
    $region10: #{tpu_custom_call.1} parent=1 // pred_check
      _
    $region11: #{tpu_custom_call.1} parent=1 // pred_check_branch
      %26 = sbr.rel (0) target = $region13
    $region12: #{tpu_custom_call.1} parent=1 // pred_region
      %s28 = ssub.s32 384, 384
      %29 = vsyncadd [#allocation4], %s28
      %s30 = sshll.u32 [#allocation3], 4
      %s31 = int_to_ptr.vmem [resolvable:$true] %s30
      %36 = dma.hbm_to_vmem [thread:$0]  %s2, 384, %s31, [#allocation4], 128, 128, 8
    $region13: #{tpu_custom_call.1} parent=1 // pred_fallthru
      _
    // Predicated region
    $region14: #{tpu_custom_call.1} parent=1 // pred_check
      _
    $region15: #{tpu_custom_call.1} parent=1 // pred_check_branch
      %38 = sbr.rel (0) target = $region17
    $region16: #{tpu_custom_call.1} parent=1 // pred_region
      %s40 = ssub.s32 384, 384
      %41 = vsyncadd [#allocation7], %s40
      %s42 = sshll.u32 [#allocation6], 4
      %s43 = int_to_ptr.vmem [resolvable:$true] %s42
      %48 = dma.hbm_to_vmem [thread:$0]  %s3, 384, %s43, [#allocation7], 128, 128, 8
    $region17: #{tpu_custom_call.1} parent=1 // pred_fallthru
      _
    // Predicated region
    $region18: #{tpu_custom_call.1} parent=1 // pred_check
      _
    $region19: #{tpu_custom_call.1} parent=1 // pred_check_branch
      %50 = sbr.rel (0) target = $region21
    $region20: #{tpu_custom_call.1} parent=1 // pred_region
      %s52 = ssub.s32 24576, 24576
      %53 = vsyncadd [#allocation7], %s52
      %s54 = sshll.u32 [#allocation8], 4
      %s55 = int_to_ptr.vmem [resolvable:$true] %s54
      %60 = dma.hbm_to_vmem [thread:$0]  %s4, 24576, %s55, [#allocation7], 256, 256, 16
    $region21: #{tpu_custom_call.1} parent=1 // pred_fallthru
      _
    // Predicated region
    $region22: #{tpu_custom_call.1} parent=1 // pred_check
      _
    $region23: #{tpu_custom_call.1} parent=1 // pred_check_branch
      %62 = sbr.rel (0) target = $region25
    $region24: #{tpu_custom_call.1} parent=1 // pred_region
      %s64 = ssub.s32 192, 192
      %65 = vsyncadd [#allocation10], %s64
      %s66 = sshll.u32 [#allocation9], 4
      %s67 = int_to_ptr.vmem [resolvable:$true] %s66
      %72 = dma.hbm_to_vmem [thread:$0]  %s5, 192, %s67, [#allocation10], 64, 64, 4
    $region25: #{tpu_custom_call.1} parent=1 // pred_fallthru
      _
    // Predicated region
    $region26: #{tpu_custom_call.1} parent=1 // pred_check
      _
    $region27: #{tpu_custom_call.1} parent=1 // pred_check_branch
      %74 = sbr.rel (0) target = $region29
    $region28: #{tpu_custom_call.1} parent=1 // pred_region
      _
    $region29: #{tpu_custom_call.1} parent=1 // pred_fallthru
      _
    // Predicated region
    $region30: #{tpu_custom_call.1} parent=1 // pred_check
      _
    $region31: #{tpu_custom_call.1} parent=1 // pred_check_branch
      %76 = sbr.rel (0) target = $region33
    $region32: #{tpu_custom_call.1} parent=1 // pred_region
      _
    $region33: #{tpu_custom_call.1} parent=1 // pred_fallthru
      _
    // Predicated region
    $region34: #{tpu_custom_call.1} parent=1 // pred_check
      _
    $region35: #{tpu_custom_call.1} parent=1 // pred_check_branch
      %78 = sbr.rel (0) target = $region37
    $region36: #{tpu_custom_call.1} parent=1 // pred_region
      %79 = dma.done [#allocation4], 384
    $region37: #{tpu_custom_call.1} parent=1 // pred_fallthru
      _
    // Predicated region
    $region38: #{tpu_custom_call.1} parent=1 // pred_check
      _
    $region39: #{tpu_custom_call.1} parent=1 // pred_check_branch
      %81 = sbr.rel (0) target = $region41
    $region40: #{tpu_custom_call.1} parent=1 // pred_region
      %82 = dma.done [#allocation7], 384
    $region41: #{tpu_custom_call.1} parent=1 // pred_fallthru
      _
    // Predicated region
    $region42: #{tpu_custom_call.1} parent=1 // pred_check
      _
    $region43: #{tpu_custom_call.1} parent=1 // pred_check_branch
      %84 = sbr.rel (0) target = $region45
    $region44: #{tpu_custom_call.1} parent=1 // pred_region
      %85 = dma.done [#allocation7], 24576
    $region45: #{tpu_custom_call.1} parent=1 // pred_fallthru
      _
    // Predicated region
    $region46: #{tpu_custom_call.1} parent=1 // pred_check
      _
    $region47: #{tpu_custom_call.1} parent=1 // pred_check_branch
      %87 = sbr.rel (0) target = $region49
    $region48: #{tpu_custom_call.1} parent=1 // pred_region
      %88 = dma.done [#allocation10], 192
    $region49: #{tpu_custom_call.1} parent=1 // pred_fallthru
      _
    %v90 = vld [vmem:[%s0] sm:$0xff]
    %v91 = vlaneseq
    %v92 = vand.u32 %v91, 127
    %93 = vset.pattern.permute.xlu0 0
    %94 = vperm.xlu0 %93, %v90
    %v95 = vpop.permute.xlu0 %94
    %vm96 = vcmp.eq.s32.totalorder %v95, %v92
    %v97 = vsel %vm96, 1, 0
    %v98 = vcvt.s32.f32 %v97
    %v99 = vpack.c.bf16 %v98, %v98
    %v100 = vld [vmem:[%s1] sm:$0xf]
    %v101 = vld [vmem:[%s1 + $0x4] sm:$0xf]
    %v102 = vld [vmem:[%s1 + $0x8] sm:$0xf]
    %v103 = vld [vmem:[%s1 + $0xc] sm:$0xf]
    %v108 = vunpack.c.l.b16 %v100
    %v109 = vunpack.c.l.b16 %v101
    %v110 = vunpack.c.l.b16 %v102
    %v111 = vunpack.c.l.b16 %v103
    %v112 = vpack.c.b16 %v109, %v108
    %v113 = vpack.c.b16 %v111, %v110
    %vm116 = vcmask 261120
    %v118 = vsel %vm116, %v99, 0
    %120 = vmatprep.subr.bf16.mxu0 0
    %121 = vmatpush1.bf16.msra.mxu0 0
    %122 = vmatprep.subr.bf16.mxu0 0
    %123 = vmatpush1.bf16.msra.mxu0 0
    %124 = vmatprep.subr.bf16.mxu0 0
    %125 = vmatpush1.bf16.msra.mxu0 0
    %126 = vmatprep.subr.bf16.mxu0 0
    %127 = vmatpush1.bf16.msra.mxu0 0
    %128 = vmatprep.subr.bf16.mxu0 0
    %129 = vmatpush1.bf16.msra.mxu0 0
    %130 = vmatprep.subr.bf16.mxu0 0
    %131 = vmatpush1.bf16.msra.mxu0 0
    %132 = vmatprep.subr.bf16.mxu0 0
    %133 = vmatpush1.bf16.msra.mxu0 %v113
    %134 = vmatprep.subr.bf16.mxu0 0
    %135 = vmatpush1.bf16.msra.mxu0 %v112
    %136 = vmatprep.subr.bf16.mxu0 0
    %137 = vmatpush2.bf16.msra.mxu0 0
    %138 = vmatprep.subr.bf16.mxu0 0
    %139 = vmatpush2.bf16.msra.mxu0 0
    %140 = vmatprep.subr.bf16.mxu0 0
    %141 = vmatpush2.bf16.msra.mxu0 0
    %142 = vmatprep.subr.bf16.mxu0 0
    %143 = vmatpush2.bf16.msra.mxu0 0
    %144 = vmatprep.subr.bf16.mxu0 0
    %145 = vmatpush2.bf16.msra.mxu0 0
    %146 = vmatprep.subr.bf16.mxu0 0
    %147 = vmatpush2.bf16.msra.mxu0 0
    %148 = vmatprep.subr.bf16.mxu0 0
    %149 = vmatpush2.bf16.msra.mxu0 0
    %150 = vmatprep.subr.bf16.mxu0 0
    %151 = vmatpush2.bf16.msra.mxu0 0
    %152 = vmatprep.mubr.bf16.mxu0 0
    %153 = vmatmul.mubr.bf16.gmra.mxu0 %v118
    %v154 = vpop.f32.mrf.mxu0
    %v155 = vadd.f32 0.0, %v154
    %v156 = vpop.f32.mrf.mxu0
    %v157 = vpop.f32.mrf.mxu0
    %v158 = vpop.f32.mrf.mxu0
    %159 = vdwg.mxu0
    %v160 = vpack.c.bf16 %v155, %v155
    %161 = vst [vmem:[#allocation2] sm:$0xf] %v160
    %v162 = vld [vmem:[#allocation3] sm:$0xff]
    %v163 = vpack.c.bf16 %v162, %v162
    %164 = vst [vmem:[#allocation2 + $0x4] sm:$0xf] %v163
    %v165 = vld [vmem:[#allocation2] sm:$0xff]
    %v166 = vld [vmem:[#allocation8] sm:$0xff]
    %v167 = vld [vmem:[#allocation8 + $0x8] sm:$0xff]
    %v168 = vld [vmem:[#allocation8 + $0x10] sm:$0xff]
    %v169 = vld [vmem:[#allocation8 + $0x18] sm:$0xff]
    %v170 = vld [vmem:[#allocation8 + $0x20] sm:$0xff]
    %v171 = vld [vmem:[#allocation8 + $0x28] sm:$0xff]
    %v172 = vld [vmem:[#allocation8 + $0x30] sm:$0xff]
    %v173 = vld [vmem:[#allocation8 + $0x38] sm:$0xff]
    %v174 = vld [vmem:[#allocation8 + $0x40] sm:$0xff]
    %v175 = vld [vmem:[#allocation8 + $0x48] sm:$0xff]
    %v176 = vld [vmem:[#allocation8 + $0x50] sm:$0xff]
    %v177 = vld [vmem:[#allocation8 + $0x58] sm:$0xff]
    %v178 = vld [vmem:[#allocation8 + $0x60] sm:$0xff]
    %v179 = vld [vmem:[#allocation8 + $0x68] sm:$0xff]
    %v180 = vld [vmem:[#allocation8 + $0x70] sm:$0xff]
    %v181 = vld [vmem:[#allocation8 + $0x78] sm:$0xff]
    %v182 = vld [vmem:[#allocation8 + $0x80] sm:$0xff]
    %v183 = vld [vmem:[#allocation8 + $0x88] sm:$0xff]
    %v184 = vld [vmem:[#allocation8 + $0x90] sm:$0xff]
    %v185 = vld [vmem:[#allocation8 + $0x98] sm:$0xff]
    %v186 = vld [vmem:[#allocation8 + $0xa0] sm:$0xff]
    %v187 = vld [vmem:[#allocation8 + $0xa8] sm:$0xff]
    %v188 = vld [vmem:[#allocation8 + $0xb0] sm:$0xff]
    %v189 = vld [vmem:[#allocation8 + $0xb8] sm:$0xff]
    %v190 = vld [vmem:[#allocation8 + $0xc0] sm:$0xff]
    %v191 = vld [vmem:[#allocation8 + $0xc8] sm:$0xff]
    %v192 = vld [vmem:[#allocation8 + $0xd0] sm:$0xff]
    %v193 = vld [vmem:[#allocation8 + $0xd8] sm:$0xff]
    %v194 = vld [vmem:[#allocation8 + $0xe0] sm:$0xff]
    %v195 = vld [vmem:[#allocation8 + $0xe8] sm:$0xff]
    %v196 = vld [vmem:[#allocation8 + $0xf0] sm:$0xff]
    %v197 = vld [vmem:[#allocation8 + $0xf8] sm:$0xff]
    %v198 = vld [vmem:[#allocation8 + $0x100] sm:$0xff]
    %v199 = vld [vmem:[#allocation8 + $0x108] sm:$0xff]
    %v200 = vld [vmem:[#allocation8 + $0x110] sm:$0xff]
    %v201 = vld [vmem:[#allocation8 + $0x118] sm:$0xff]
    %v202 = vld [vmem:[#allocation8 + $0x120] sm:$0xff]
    %v203 = vld [vmem:[#allocation8 + $0x128] sm:$0xff]
    %v204 = vld [vmem:[#allocation8 + $0x130] sm:$0xff]
    %v205 = vld [vmem:[#allocation8 + $0x138] sm:$0xff]
    %v206 = vld [vmem:[#allocation8 + $0x140] sm:$0xff]
    %v207 = vld [vmem:[#allocation8 + $0x148] sm:$0xff]
    %v208 = vld [vmem:[#allocation8 + $0x150] sm:$0xff]
    %v209 = vld [vmem:[#allocation8 + $0x158] sm:$0xff]
    %v210 = vld [vmem:[#allocation8 + $0x160] sm:$0xff]
    %v211 = vld [vmem:[#allocation8 + $0x168] sm:$0xff]
    %v212 = vld [vmem:[#allocation8 + $0x170] sm:$0xff]
    %v213 = vld [vmem:[#allocation8 + $0x178] sm:$0xff]
    %v214 = vld [vmem:[#allocation8 + $0x180] sm:$0xff]
    %v215 = vld [vmem:[#allocation8 + $0x188] sm:$0xff]
    %v216 = vld [vmem:[#allocation8 + $0x190] sm:$0xff]
    %v217 = vld [vmem:[#allocation8 + $0x198] sm:$0xff]
    %v218 = vld [vmem:[#allocation8 + $0x1a0] sm:$0xff]
    %v219 = vld [vmem:[#allocation8 + $0x1a8] sm:$0xff]
    %v220 = vld [vmem:[#allocation8 + $0x1b0] sm:$0xff]
    %v221 = vld [vmem:[#allocation8 + $0x1b8] sm:$0xff]
    %v222 = vld [vmem:[#allocation8 + $0x1c0] sm:$0xff]
    %v223 = vld [vmem:[#allocation8 + $0x1c8] sm:$0xff]
    %v224 = vld [vmem:[#allocation8 + $0x1d0] sm:$0xff]
    %v225 = vld [vmem:[#allocation8 + $0x1d8] sm:$0xff]
    %v226 = vld [vmem:[#allocation8 + $0x1e0] sm:$0xff]
    %v227 = vld [vmem:[#allocation8 + $0x1e8] sm:$0xff]
    %v228 = vld [vmem:[#allocation8 + $0x1f0] sm:$0xff]
    %v229 = vld [vmem:[#allocation8 + $0x1f8] sm:$0xff]
    %v230 = vld [vmem:[#allocation9] sm:$0xf]
    %v232 = vlaneseq
    %v233 = vshrl.u32 %v232, 7
    %v234 = vsub.s32 0, %v233
    %v235 = vrot.slane %v230, %v234
    %v236 = vlaneseq
    %v237 = vshrl.u32 %v236, 7
    %v238 = vsub.s32 1, %v237
    %v239 = vrot.slane %v230, %v238
    %v240 = vlaneseq
    %v241 = vshrl.u32 %v240, 7
    %v242 = vsub.s32 2, %v241
    %v243 = vrot.slane %v230, %v242
    %v244 = vlaneseq
    %v245 = vshrl.u32 %v244, 7
    %v246 = vsub.s32 3, %v245
    %v247 = vrot.slane %v230, %v246
    %v253 = vunpack.c.l.b16 %v165
    %v254 = vunpack.c.h.b16 %v165
    %v255 = vpack.c.b16 %v253, %v253
    %v256 = vpack.c.b16 %v254, %v254
    %v323 = vunpack.c.l.b16 %v166
    %v324 = vunpack.c.h.b16 %v166
    %v325 = vunpack.c.l.b16 %v167
    %v326 = vunpack.c.h.b16 %v167
    %v327 = vunpack.c.l.b16 %v168
    %v328 = vunpack.c.h.b16 %v168
    %v329 = vunpack.c.l.b16 %v169
    %v330 = vunpack.c.h.b16 %v169
    %v331 = vunpack.c.l.b16 %v170
    %v332 = vunpack.c.h.b16 %v170
    %v333 = vunpack.c.l.b16 %v171
    %v334 = vunpack.c.h.b16 %v171
    %v335 = vunpack.c.l.b16 %v172
    %v336 = vunpack.c.h.b16 %v172
    %v337 = vunpack.c.l.b16 %v173
    %v338 = vunpack.c.h.b16 %v173
    %v339 = vunpack.c.l.b16 %v174
    %v340 = vunpack.c.h.b16 %v174
    %v341 = vunpack.c.l.b16 %v175
    %v342 = vunpack.c.h.b16 %v175
    %v343 = vunpack.c.l.b16 %v176
    %v344 = vunpack.c.h.b16 %v176
    %v345 = vunpack.c.l.b16 %v177
    %v346 = vunpack.c.h.b16 %v177
    %v347 = vunpack.c.l.b16 %v178
    %v348 = vunpack.c.h.b16 %v178
    %v349 = vunpack.c.l.b16 %v179
    %v350 = vunpack.c.h.b16 %v179
    %v351 = vunpack.c.l.b16 %v180
    %v352 = vunpack.c.h.b16 %v180
    %v353 = vunpack.c.l.b16 %v181
    %v354 = vunpack.c.h.b16 %v181
    %v355 = vunpack.c.l.b16 %v182
    %v356 = vunpack.c.h.b16 %v182
    %v357 = vunpack.c.l.b16 %v183
    %v358 = vunpack.c.h.b16 %v183
    %v359 = vunpack.c.l.b16 %v184
    %v360 = vunpack.c.h.b16 %v184
    %v361 = vunpack.c.l.b16 %v185
    %v362 = vunpack.c.h.b16 %v185
    %v363 = vunpack.c.l.b16 %v186
    %v364 = vunpack.c.h.b16 %v186
    %v365 = vunpack.c.l.b16 %v187
    %v366 = vunpack.c.h.b16 %v187
    %v367 = vunpack.c.l.b16 %v188
    %v368 = vunpack.c.h.b16 %v188
    %v369 = vunpack.c.l.b16 %v189
    %v370 = vunpack.c.h.b16 %v189
    %v371 = vunpack.c.l.b16 %v190
    %v372 = vunpack.c.h.b16 %v190
    %v373 = vunpack.c.l.b16 %v191
    %v374 = vunpack.c.h.b16 %v191
    %v375 = vunpack.c.l.b16 %v192
    %v376 = vunpack.c.h.b16 %v192
    %v377 = vunpack.c.l.b16 %v193
    %v378 = vunpack.c.h.b16 %v193
    %v379 = vunpack.c.l.b16 %v194
    %v380 = vunpack.c.h.b16 %v194
    %v381 = vunpack.c.l.b16 %v195
    %v382 = vunpack.c.h.b16 %v195
    %v383 = vunpack.c.l.b16 %v196
    %v384 = vunpack.c.h.b16 %v196
    %v385 = vunpack.c.l.b16 %v197
    %v386 = vunpack.c.h.b16 %v197
    %v387 = vunpack.c.l.b16 %v198
    %v388 = vunpack.c.h.b16 %v198
    %v389 = vunpack.c.l.b16 %v199
    %v390 = vunpack.c.h.b16 %v199
    %v391 = vunpack.c.l.b16 %v200
    %v392 = vunpack.c.h.b16 %v200
    %v393 = vunpack.c.l.b16 %v201
    %v394 = vunpack.c.h.b16 %v201
    %v395 = vunpack.c.l.b16 %v202
    %v396 = vunpack.c.h.b16 %v202
    %v397 = vunpack.c.l.b16 %v203
    %v398 = vunpack.c.h.b16 %v203
    %v399 = vunpack.c.l.b16 %v204
    %v400 = vunpack.c.h.b16 %v204
    %v401 = vunpack.c.l.b16 %v205
    %v402 = vunpack.c.h.b16 %v205
    %v403 = vunpack.c.l.b16 %v206
    %v404 = vunpack.c.h.b16 %v206
    %v405 = vunpack.c.l.b16 %v207
    %v406 = vunpack.c.h.b16 %v207
    %v407 = vunpack.c.l.b16 %v208
    %v408 = vunpack.c.h.b16 %v208
    %v409 = vunpack.c.l.b16 %v209
    %v410 = vunpack.c.h.b16 %v209
    %v411 = vunpack.c.l.b16 %v210
    %v412 = vunpack.c.h.b16 %v210
    %v413 = vunpack.c.l.b16 %v211
    %v414 = vunpack.c.h.b16 %v211
    %v415 = vunpack.c.l.b16 %v212
    %v416 = vunpack.c.h.b16 %v212
    %v417 = vunpack.c.l.b16 %v213
    %v418 = vunpack.c.h.b16 %v213
    %v419 = vunpack.c.l.b16 %v214
    %v420 = vunpack.c.h.b16 %v214
    %v421 = vunpack.c.l.b16 %v215
    %v422 = vunpack.c.h.b16 %v215
    %v423 = vunpack.c.l.b16 %v216
    %v424 = vunpack.c.h.b16 %v216
    %v425 = vunpack.c.l.b16 %v217
    %v426 = vunpack.c.h.b16 %v217
    %v427 = vunpack.c.l.b16 %v218
    %v428 = vunpack.c.h.b16 %v218
    %v429 = vunpack.c.l.b16 %v219
    %v430 = vunpack.c.h.b16 %v219
    %v431 = vunpack.c.l.b16 %v220
    %v432 = vunpack.c.h.b16 %v220
    %v433 = vunpack.c.l.b16 %v221
    %v434 = vunpack.c.h.b16 %v221
    %v435 = vunpack.c.l.b16 %v222
    %v436 = vunpack.c.h.b16 %v222
    %v437 = vunpack.c.l.b16 %v223
    %v438 = vunpack.c.h.b16 %v223
    %v439 = vunpack.c.l.b16 %v224
    %v440 = vunpack.c.h.b16 %v224
    %v441 = vunpack.c.l.b16 %v225
    %v442 = vunpack.c.h.b16 %v225
    %v443 = vunpack.c.l.b16 %v226
    %v444 = vunpack.c.h.b16 %v226
    %v445 = vunpack.c.l.b16 %v227
    %v446 = vunpack.c.h.b16 %v227
    %v447 = vunpack.c.l.b16 %v228
    %v448 = vunpack.c.h.b16 %v228
    %v449 = vunpack.c.l.b16 %v229
    %v450 = vunpack.c.h.b16 %v229
    %v451 = vpack.c.b16 %v327, %v323
    %v452 = vpack.c.b16 %v328, %v324
    %v453 = vpack.c.b16 %v329, %v325
    %v454 = vpack.c.b16 %v330, %v326
    %v455 = vpack.c.b16 %v335, %v331
    %v456 = vpack.c.b16 %v336, %v332
    %v457 = vpack.c.b16 %v337, %v333
    %v458 = vpack.c.b16 %v338, %v334
    %v459 = vpack.c.b16 %v343, %v339
    %v460 = vpack.c.b16 %v344, %v340
    %v461 = vpack.c.b16 %v345, %v341
    %v462 = vpack.c.b16 %v346, %v342
    %v463 = vpack.c.b16 %v351, %v347
    %v464 = vpack.c.b16 %v352, %v348
    %v465 = vpack.c.b16 %v353, %v349
    %v466 = vpack.c.b16 %v354, %v350
    %v467 = vpack.c.b16 %v359, %v355
    %v468 = vpack.c.b16 %v360, %v356
    %v469 = vpack.c.b16 %v361, %v357
    %v470 = vpack.c.b16 %v362, %v358
    %v471 = vpack.c.b16 %v367, %v363
    %v472 = vpack.c.b16 %v368, %v364
    %v473 = vpack.c.b16 %v369, %v365
    %v474 = vpack.c.b16 %v370, %v366
    %v475 = vpack.c.b16 %v375, %v371
    %v476 = vpack.c.b16 %v376, %v372
    %v477 = vpack.c.b16 %v377, %v373
    %v478 = vpack.c.b16 %v378, %v374
    %v479 = vpack.c.b16 %v383, %v379
    %v480 = vpack.c.b16 %v384, %v380
    %v481 = vpack.c.b16 %v385, %v381
    %v482 = vpack.c.b16 %v386, %v382
    %v483 = vpack.c.b16 %v391, %v387
    %v484 = vpack.c.b16 %v392, %v388
    %v485 = vpack.c.b16 %v393, %v389
    %v486 = vpack.c.b16 %v394, %v390
    %v487 = vpack.c.b16 %v399, %v395
    %v488 = vpack.c.b16 %v400, %v396
    %v489 = vpack.c.b16 %v401, %v397
    %v490 = vpack.c.b16 %v402, %v398
    %v491 = vpack.c.b16 %v407, %v403
    %v492 = vpack.c.b16 %v408, %v404
    %v493 = vpack.c.b16 %v409, %v405
    %v494 = vpack.c.b16 %v410, %v406
    %v495 = vpack.c.b16 %v415, %v411
    %v496 = vpack.c.b16 %v416, %v412
    %v497 = vpack.c.b16 %v417, %v413
    %v498 = vpack.c.b16 %v418, %v414
    %v499 = vpack.c.b16 %v423, %v419
    %v500 = vpack.c.b16 %v424, %v420
    %v501 = vpack.c.b16 %v425, %v421
    %v502 = vpack.c.b16 %v426, %v422
    %v503 = vpack.c.b16 %v431, %v427
    %v504 = vpack.c.b16 %v432, %v428
    %v505 = vpack.c.b16 %v433, %v429
    %v506 = vpack.c.b16 %v434, %v430
    %v507 = vpack.c.b16 %v439, %v435
    %v508 = vpack.c.b16 %v440, %v436
    %v509 = vpack.c.b16 %v441, %v437
    %v510 = vpack.c.b16 %v442, %v438
    %v511 = vpack.c.b16 %v447, %v443
    %v512 = vpack.c.b16 %v448, %v444
    %v513 = vpack.c.b16 %v449, %v445
    %v514 = vpack.c.b16 %v450, %v446
    %579 = vmatprep.subr.bf16.mxu0 %v480
    %580 = vmatpush1.bf16.msra.mxu0 %v479
    %581 = vmatprep.subr.bf16.mxu0 %v476
    %582 = vmatpush1.bf16.msra.mxu0 %v475
    %583 = vmatprep.subr.bf16.mxu0 %v472
    %584 = vmatpush1.bf16.msra.mxu0 %v471
    %585 = vmatprep.subr.bf16.mxu0 %v468
    %586 = vmatpush1.bf16.msra.mxu0 %v467
    %587 = vmatprep.subr.bf16.mxu0 %v464
    %588 = vmatpush1.bf16.msra.mxu0 %v463
    %589 = vmatprep.subr.bf16.mxu0 %v460
    %590 = vmatpush1.bf16.msra.mxu0 %v459
    %591 = vmatprep.subr.bf16.mxu0 %v456
    %592 = vmatpush1.bf16.msra.mxu0 %v455
    %593 = vmatprep.subr.bf16.mxu0 %v452
    %594 = vmatpush1.bf16.msra.mxu0 %v451
    %595 = vmatprep.subr.bf16.mxu0 %v512
    %596 = vmatpush2.bf16.msra.mxu0 %v511
    %597 = vmatprep.subr.bf16.mxu0 %v508
    %598 = vmatpush2.bf16.msra.mxu0 %v507
    %599 = vmatprep.subr.bf16.mxu0 %v504
    %600 = vmatpush2.bf16.msra.mxu0 %v503
    %601 = vmatprep.subr.bf16.mxu0 %v500
    %602 = vmatpush2.bf16.msra.mxu0 %v499
    %603 = vmatprep.subr.bf16.mxu0 %v496
    %604 = vmatpush2.bf16.msra.mxu0 %v495
    %605 = vmatprep.subr.bf16.mxu0 %v492
    %606 = vmatpush2.bf16.msra.mxu0 %v491
    %607 = vmatprep.subr.bf16.mxu0 %v488
    %608 = vmatpush2.bf16.msra.mxu0 %v487
    %609 = vmatprep.subr.bf16.mxu0 %v484
    %610 = vmatpush2.bf16.msra.mxu0 %v483
    %611 = vmatprep.mubr.bf16.mxu0 %v256
    %612 = vmatmul.mubr.bf16.gmra.mxu0 %v255
    %v613 = vpop.f32.mrf.mxu0
    %v614 = vadd.f32 %v235, %v613
    %v615 = vpop.f32.mrf.mxu0
    %v616 = vadd.f32 %v239, %v615
    %v617 = vpop.f32.mrf.mxu0
    %v618 = vpop.f32.mrf.mxu0
    %619 = vdwg.mxu0
    %620 = vmatprep.subr.bf16.mxu0 %v482
    %621 = vmatpush1.bf16.msra.mxu0 %v481
    %622 = vmatprep.subr.bf16.mxu0 %v478
    %623 = vmatpush1.bf16.msra.mxu0 %v477
    %624 = vmatprep.subr.bf16.mxu0 %v474
    %625 = vmatpush1.bf16.msra.mxu0 %v473
    %626 = vmatprep.subr.bf16.mxu0 %v470
    %627 = vmatpush1.bf16.msra.mxu0 %v469
    %628 = vmatprep.subr.bf16.mxu0 %v466
    %629 = vmatpush1.bf16.msra.mxu0 %v465
    %630 = vmatprep.subr.bf16.mxu0 %v462
    %631 = vmatpush1.bf16.msra.mxu0 %v461
    %632 = vmatprep.subr.bf16.mxu0 %v458
    %633 = vmatpush1.bf16.msra.mxu0 %v457
    %634 = vmatprep.subr.bf16.mxu0 %v454
    %635 = vmatpush1.bf16.msra.mxu0 %v453
    %636 = vmatprep.subr.bf16.mxu0 %v514
    %637 = vmatpush2.bf16.msra.mxu0 %v513
    %638 = vmatprep.subr.bf16.mxu0 %v510
    %639 = vmatpush2.bf16.msra.mxu0 %v509
    %640 = vmatprep.subr.bf16.mxu0 %v506
    %641 = vmatpush2.bf16.msra.mxu0 %v505
    %642 = vmatprep.subr.bf16.mxu0 %v502
    %643 = vmatpush2.bf16.msra.mxu0 %v501
    %644 = vmatprep.subr.bf16.mxu0 %v498
    %645 = vmatpush2.bf16.msra.mxu0 %v497
    %646 = vmatprep.subr.bf16.mxu0 %v494
    %647 = vmatpush2.bf16.msra.mxu0 %v493
    %648 = vmatprep.subr.bf16.mxu0 %v490
    %649 = vmatpush2.bf16.msra.mxu0 %v489
    %650 = vmatprep.subr.bf16.mxu0 %v486
    %651 = vmatpush2.bf16.msra.mxu0 %v485
    %652 = vmatprep.mubr.bf16.mxu0 %v256
    %653 = vmatmul.mubr.bf16.gmra.mxu0 %v255
    %v654 = vpop.f32.mrf.mxu0
    %v655 = vadd.f32 %v243, %v654
    %v656 = vpop.f32.mrf.mxu0
    %v657 = vadd.f32 %v247, %v656
    %v658 = vpop.f32.mrf.mxu0
    %v659 = vpop.f32.mrf.mxu0
    %660 = vdwg.mxu0
    %v661 = vxor.u32 %v614, 2147483648
    %v662 = vmul.f32 %v661, 1.442695
    %v663 = vpow.pop %v662
    %v664 = vadd.f32 %v663, 1.0
    %v665 = vrcp.pop %v664
    %v666 = vmul.f32 1.0, %v665
    %v667 = vxor.u32 %v616, 2147483648
    %v668 = vmul.f32 %v667, 1.442695
    %v669 = vpow.pop %v668
    %v670 = vadd.f32 %v669, 1.0
    %v671 = vrcp.pop %v670
    %v672 = vmul.f32 1.0, %v671
    %v673 = vtanh.pop %v655
    %v674 = vxor.u32 %v657, 2147483648
    %v675 = vmul.f32 %v674, 1.442695
    %v676 = vpow.pop %v675
    %v677 = vadd.f32 %v676, 1.0
    %v678 = vrcp.pop %v677
    %v679 = vmul.f32 1.0, %v678
    %v680 = vld [vmem:[#allocation6] sm:$0xff]
    %v681 = vmul.f32 %v672, %v680
    %v682 = vmul.f32 %v666, %v673
    %v683 = vadd.f32 %v681, %v682
    %v684 = vtanh.pop %v683
    %v685 = vmul.f32 %v679, %v684
    %686 = vst [vmem:[#allocation12] sm:$0xff] %v685
    %687 = vst [vmem:[#allocation14] sm:$0xff] %v683
    %v688 = vpack.c.bf16 %v685, %v685
    %689 = vst [vmem:[#allocation2] sm:$0xf] %v688
    %s690 = scalar_lea.vmem [#allocation3], 8
    %v691 = vld [vmem:[%s690] sm:$0xff]
    %v692 = vpack.c.bf16 %v691, %v691
    %693 = vst [vmem:[#allocation2 + $0x4] sm:$0xf] %v692
    %v694 = vld [vmem:[#allocation2] sm:$0xff]
    %s695 = scalar_lea.vmem [#allocation8], 512
    %v696 = vld [vmem:[%s695] sm:$0xff]
    %v697 = vld [vmem:[%s695 + $0x8] sm:$0xff]
    %v698 = vld [vmem:[%s695 + $0x10] sm:$0xff]
    %v699 = vld [vmem:[%s695 + $0x18] sm:$0xff]
    %v700 = vld [vmem:[%s695 + $0x20] sm:$0xff]
    %v701 = vld [vmem:[%s695 + $0x28] sm:$0xff]
    %v702 = vld [vmem:[%s695 + $0x30] sm:$0xff]
    %v703 = vld [vmem:[%s695 + $0x38] sm:$0xff]
    %v704 = vld [vmem:[%s695 + $0x40] sm:$0xff]
    %v705 = vld [vmem:[%s695 + $0x48] sm:$0xff]
    %v706 = vld [vmem:[%s695 + $0x50] sm:$0xff]
    %v707 = vld [vmem:[%s695 + $0x58] sm:$0xff]
    %v708 = vld [vmem:[%s695 + $0x60] sm:$0xff]
    %v709 = vld [vmem:[%s695 + $0x68] sm:$0xff]
    %v710 = vld [vmem:[%s695 + $0x70] sm:$0xff]
    %v711 = vld [vmem:[%s695 + $0x78] sm:$0xff]
    %v712 = vld [vmem:[%s695 + $0x80] sm:$0xff]
    %v713 = vld [vmem:[%s695 + $0x88] sm:$0xff]
    %v714 = vld [vmem:[%s695 + $0x90] sm:$0xff]
    %v715 = vld [vmem:[%s695 + $0x98] sm:$0xff]
    %v716 = vld [vmem:[%s695 + $0xa0] sm:$0xff]
    %v717 = vld [vmem:[%s695 + $0xa8] sm:$0xff]
    %v718 = vld [vmem:[%s695 + $0xb0] sm:$0xff]
    %v719 = vld [vmem:[%s695 + $0xb8] sm:$0xff]
    %v720 = vld [vmem:[%s695 + $0xc0] sm:$0xff]
    %v721 = vld [vmem:[%s695 + $0xc8] sm:$0xff]
    %v722 = vld [vmem:[%s695 + $0xd0] sm:$0xff]
    %v723 = vld [vmem:[%s695 + $0xd8] sm:$0xff]
    %v724 = vld [vmem:[%s695 + $0xe0] sm:$0xff]
    %v725 = vld [vmem:[%s695 + $0xe8] sm:$0xff]
    %v726 = vld [vmem:[%s695 + $0xf0] sm:$0xff]
    %v727 = vld [vmem:[%s695 + $0xf8] sm:$0xff]
    %v728 = vld [vmem:[%s695 + $0x100] sm:$0xff]
    %v729 = vld [vmem:[%s695 + $0x108] sm:$0xff]
    %v730 = vld [vmem:[%s695 + $0x110] sm:$0xff]
    %v731 = vld [vmem:[%s695 + $0x118] sm:$0xff]
    %v732 = vld [vmem:[%s695 + $0x120] sm:$0xff]
    %v733 = vld [vmem:[%s695 + $0x128] sm:$0xff]
    %v734 = vld [vmem:[%s695 + $0x130] sm:$0xff]
    %v735 = vld [vmem:[%s695 + $0x138] sm:$0xff]
    %v736 = vld [vmem:[%s695 + $0x140] sm:$0xff]
    %v737 = vld [vmem:[%s695 + $0x148] sm:$0xff]
    %v738 = vld [vmem:[%s695 + $0x150] sm:$0xff]
    %v739 = vld [vmem:[%s695 + $0x158] sm:$0xff]
    %v740 = vld [vmem:[%s695 + $0x160] sm:$0xff]
    %v741 = vld [vmem:[%s695 + $0x168] sm:$0xff]
    %v742 = vld [vmem:[%s695 + $0x170] sm:$0xff]
    %v743 = vld [vmem:[%s695 + $0x178] sm:$0xff]
    %v744 = vld [vmem:[%s695 + $0x180] sm:$0xff]
    %v745 = vld [vmem:[%s695 + $0x188] sm:$0xff]
    %v746 = vld [vmem:[%s695 + $0x190] sm:$0xff]
    %v747 = vld [vmem:[%s695 + $0x198] sm:$0xff]
    %v748 = vld [vmem:[%s695 + $0x1a0] sm:$0xff]
    %v749 = vld [vmem:[%s695 + $0x1a8] sm:$0xff]
    %v750 = vld [vmem:[%s695 + $0x1b0] sm:$0xff]
    %v751 = vld [vmem:[%s695 + $0x1b8] sm:$0xff]
    %v752 = vld [vmem:[%s695 + $0x1c0] sm:$0xff]
    %v753 = vld [vmem:[%s695 + $0x1c8] sm:$0xff]
    %v754 = vld [vmem:[%s695 + $0x1d0] sm:$0xff]
    %v755 = vld [vmem:[%s695 + $0x1d8] sm:$0xff]
    %v756 = vld [vmem:[%s695 + $0x1e0] sm:$0xff]
    %v757 = vld [vmem:[%s695 + $0x1e8] sm:$0xff]
    %v758 = vld [vmem:[%s695 + $0x1f0] sm:$0xff]
    %v759 = vld [vmem:[%s695 + $0x1f8] sm:$0xff]
    %s760 = scalar_lea.vmem [#allocation9], 4
    %v761 = vld [vmem:[%s760] sm:$0xf]
    %v763 = vlaneseq
    %v764 = vshrl.u32 %v763, 7
    %v765 = vsub.s32 0, %v764
    %v766 = vrot.slane %v761, %v765
    %v767 = vlaneseq
    %v768 = vshrl.u32 %v767, 7
    %v769 = vsub.s32 1, %v768
    %v770 = vrot.slane %v761, %v769
    %v771 = vlaneseq
    %v772 = vshrl.u32 %v771, 7
    %v773 = vsub.s32 2, %v772
    %v774 = vrot.slane %v761, %v773
    %v775 = vlaneseq
    %v776 = vshrl.u32 %v775, 7
    %v777 = vsub.s32 3, %v776
    %v778 = vrot.slane %v761, %v777
    %v784 = vunpack.c.l.b16 %v694
    %v785 = vunpack.c.h.b16 %v694
    %v786 = vpack.c.b16 %v784, %v784
    %v787 = vpack.c.b16 %v785, %v785
    %v854 = vunpack.c.l.b16 %v696
    %v855 = vunpack.c.h.b16 %v696
    %v856 = vunpack.c.l.b16 %v697
    %v857 = vunpack.c.h.b16 %v697
    %v858 = vunpack.c.l.b16 %v698
    %v859 = vunpack.c.h.b16 %v698
    %v860 = vunpack.c.l.b16 %v699
    %v861 = vunpack.c.h.b16 %v699
    %v862 = vunpack.c.l.b16 %v700
    %v863 = vunpack.c.h.b16 %v700
    %v864 = vunpack.c.l.b16 %v701
    %v865 = vunpack.c.h.b16 %v701
    %v866 = vunpack.c.l.b16 %v702
    %v867 = vunpack.c.h.b16 %v702
    %v868 = vunpack.c.l.b16 %v703
    %v869 = vunpack.c.h.b16 %v703
    %v870 = vunpack.c.l.b16 %v704
    %v871 = vunpack.c.h.b16 %v704
    %v872 = vunpack.c.l.b16 %v705
    %v873 = vunpack.c.h.b16 %v705
    %v874 = vunpack.c.l.b16 %v706
    %v875 = vunpack.c.h.b16 %v706
    %v876 = vunpack.c.l.b16 %v707
    %v877 = vunpack.c.h.b16 %v707
    %v878 = vunpack.c.l.b16 %v708
    %v879 = vunpack.c.h.b16 %v708
    %v880 = vunpack.c.l.b16 %v709
    %v881 = vunpack.c.h.b16 %v709
    %v882 = vunpack.c.l.b16 %v710
    %v883 = vunpack.c.h.b16 %v710
    %v884 = vunpack.c.l.b16 %v711
    %v885 = vunpack.c.h.b16 %v711
    %v886 = vunpack.c.l.b16 %v712
    %v887 = vunpack.c.h.b16 %v712
    %v888 = vunpack.c.l.b16 %v713
    %v889 = vunpack.c.h.b16 %v713
    %v890 = vunpack.c.l.b16 %v714
    %v891 = vunpack.c.h.b16 %v714
    %v892 = vunpack.c.l.b16 %v715
    %v893 = vunpack.c.h.b16 %v715
    %v894 = vunpack.c.l.b16 %v716
    %v895 = vunpack.c.h.b16 %v716
    %v896 = vunpack.c.l.b16 %v717
    %v897 = vunpack.c.h.b16 %v717
    %v898 = vunpack.c.l.b16 %v718
    %v899 = vunpack.c.h.b16 %v718
    %v900 = vunpack.c.l.b16 %v719
    %v901 = vunpack.c.h.b16 %v719
    %v902 = vunpack.c.l.b16 %v720
    %v903 = vunpack.c.h.b16 %v720
    %v904 = vunpack.c.l.b16 %v721
    %v905 = vunpack.c.h.b16 %v721
    %v906 = vunpack.c.l.b16 %v722
    %v907 = vunpack.c.h.b16 %v722
    %v908 = vunpack.c.l.b16 %v723
    %v909 = vunpack.c.h.b16 %v723
    %v910 = vunpack.c.l.b16 %v724
    %v911 = vunpack.c.h.b16 %v724
    %v912 = vunpack.c.l.b16 %v725
    %v913 = vunpack.c.h.b16 %v725
    %v914 = vunpack.c.l.b16 %v726
    %v915 = vunpack.c.h.b16 %v726
    %v916 = vunpack.c.l.b16 %v727
    %v917 = vunpack.c.h.b16 %v727
    %v918 = vunpack.c.l.b16 %v728
    %v919 = vunpack.c.h.b16 %v728
    %v920 = vunpack.c.l.b16 %v729
    %v921 = vunpack.c.h.b16 %v729
    %v922 = vunpack.c.l.b16 %v730
    %v923 = vunpack.c.h.b16 %v730
    %v924 = vunpack.c.l.b16 %v731
    %v925 = vunpack.c.h.b16 %v731
    %v926 = vunpack.c.l.b16 %v732
    %v927 = vunpack.c.h.b16 %v732
    %v928 = vunpack.c.l.b16 %v733
    %v929 = vunpack.c.h.b16 %v733
    %v930 = vunpack.c.l.b16 %v734
    %v931 = vunpack.c.h.b16 %v734
    %v932 = vunpack.c.l.b16 %v735
    %v933 = vunpack.c.h.b16 %v735
    %v934 = vunpack.c.l.b16 %v736
    %v935 = vunpack.c.h.b16 %v736
    %v936 = vunpack.c.l.b16 %v737
    %v937 = vunpack.c.h.b16 %v737
    %v938 = vunpack.c.l.b16 %v738
    %v939 = vunpack.c.h.b16 %v738
    %v940 = vunpack.c.l.b16 %v739
    %v941 = vunpack.c.h.b16 %v739
    %v942 = vunpack.c.l.b16 %v740
    %v943 = vunpack.c.h.b16 %v740
    %v944 = vunpack.c.l.b16 %v741
    %v945 = vunpack.c.h.b16 %v741
    %v946 = vunpack.c.l.b16 %v742
    %v947 = vunpack.c.h.b16 %v742
    %v948 = vunpack.c.l.b16 %v743
    %v949 = vunpack.c.h.b16 %v743
    %v950 = vunpack.c.l.b16 %v744
    %v951 = vunpack.c.h.b16 %v744
    %v952 = vunpack.c.l.b16 %v745
    %v953 = vunpack.c.h.b16 %v745
    %v954 = vunpack.c.l.b16 %v746
    %v955 = vunpack.c.h.b16 %v746
    %v956 = vunpack.c.l.b16 %v747
    %v957 = vunpack.c.h.b16 %v747
    %v958 = vunpack.c.l.b16 %v748
    %v959 = vunpack.c.h.b16 %v748
    %v960 = vunpack.c.l.b16 %v749
    %v961 = vunpack.c.h.b16 %v749
    %v962 = vunpack.c.l.b16 %v750
    %v963 = vunpack.c.h.b16 %v750
    %v964 = vunpack.c.l.b16 %v751
    %v965 = vunpack.c.h.b16 %v751
    %v966 = vunpack.c.l.b16 %v752
    %v967 = vunpack.c.h.b16 %v752
    %v968 = vunpack.c.l.b16 %v753
    %v969 = vunpack.c.h.b16 %v753
    %v970 = vunpack.c.l.b16 %v754
    %v971 = vunpack.c.h.b16 %v754
    %v972 = vunpack.c.l.b16 %v755
    %v973 = vunpack.c.h.b16 %v755
    %v974 = vunpack.c.l.b16 %v756
    %v975 = vunpack.c.h.b16 %v756
    %v976 = vunpack.c.l.b16 %v757
    %v977 = vunpack.c.h.b16 %v757
    %v978 = vunpack.c.l.b16 %v758
    %v979 = vunpack.c.h.b16 %v758
    %v980 = vunpack.c.l.b16 %v759
    %v981 = vunpack.c.h.b16 %v759
    %v982 = vpack.c.b16 %v858, %v854
    %v983 = vpack.c.b16 %v859, %v855
    %v984 = vpack.c.b16 %v860, %v856
    %v985 = vpack.c.b16 %v861, %v857
    %v986 = vpack.c.b16 %v866, %v862
    %v987 = vpack.c.b16 %v867, %v863
    %v988 = vpack.c.b16 %v868, %v864
    %v989 = vpack.c.b16 %v869, %v865
    %v990 = vpack.c.b16 %v874, %v870
    %v991 = vpack.c.b16 %v875, %v871
    %v992 = vpack.c.b16 %v876, %v872
    %v993 = vpack.c.b16 %v877, %v873
    %v994 = vpack.c.b16 %v882, %v878
    %v995 = vpack.c.b16 %v883, %v879
    %v996 = vpack.c.b16 %v884, %v880
    %v997 = vpack.c.b16 %v885, %v881
    %v998 = vpack.c.b16 %v890, %v886
    %v999 = vpack.c.b16 %v891, %v887
    %v1000 = vpack.c.b16 %v892, %v888
    %v1001 = vpack.c.b16 %v893, %v889
    %v1002 = vpack.c.b16 %v898, %v894
    %v1003 = vpack.c.b16 %v899, %v895
    %v1004 = vpack.c.b16 %v900, %v896
    %v1005 = vpack.c.b16 %v901, %v897
    %v1006 = vpack.c.b16 %v906, %v902
    %v1007 = vpack.c.b16 %v907, %v903
    %v1008 = vpack.c.b16 %v908, %v904
    %v1009 = vpack.c.b16 %v909, %v905
    %v1010 = vpack.c.b16 %v914, %v910
    %v1011 = vpack.c.b16 %v915, %v911
    %v1012 = vpack.c.b16 %v916, %v912
    %v1013 = vpack.c.b16 %v917, %v913
    %v1014 = vpack.c.b16 %v922, %v918
    %v1015 = vpack.c.b16 %v923, %v919
    %v1016 = vpack.c.b16 %v924, %v920
    %v1017 = vpack.c.b16 %v925, %v921
    %v1018 = vpack.c.b16 %v930, %v926
    %v1019 = vpack.c.b16 %v931, %v927
    %v1020 = vpack.c.b16 %v932, %v928
    %v1021 = vpack.c.b16 %v933, %v929
    %v1022 = vpack.c.b16 %v938, %v934
    %v1023 = vpack.c.b16 %v939, %v935
    %v1024 = vpack.c.b16 %v940, %v936
    %v1025 = vpack.c.b16 %v941, %v937
    %v1026 = vpack.c.b16 %v946, %v942
    %v1027 = vpack.c.b16 %v947, %v943
    %v1028 = vpack.c.b16 %v948, %v944
    %v1029 = vpack.c.b16 %v949, %v945
    %v1030 = vpack.c.b16 %v954, %v950
    %v1031 = vpack.c.b16 %v955, %v951
    %v1032 = vpack.c.b16 %v956, %v952
    %v1033 = vpack.c.b16 %v957, %v953
    %v1034 = vpack.c.b16 %v962, %v958
    %v1035 = vpack.c.b16 %v963, %v959
    %v1036 = vpack.c.b16 %v964, %v960
    %v1037 = vpack.c.b16 %v965, %v961
    %v1038 = vpack.c.b16 %v970, %v966
    %v1039 = vpack.c.b16 %v971, %v967
    %v1040 = vpack.c.b16 %v972, %v968
    %v1041 = vpack.c.b16 %v973, %v969
    %v1042 = vpack.c.b16 %v978, %v974
    %v1043 = vpack.c.b16 %v979, %v975
    %v1044 = vpack.c.b16 %v980, %v976
    %v1045 = vpack.c.b16 %v981, %v977
    %1110 = vmatprep.subr.bf16.mxu0 %v1011
    %1111 = vmatpush1.bf16.msra.mxu0 %v1010
    %1112 = vmatprep.subr.bf16.mxu0 %v1007
    %1113 = vmatpush1.bf16.msra.mxu0 %v1006
    %1114 = vmatprep.subr.bf16.mxu0 %v1003
    %1115 = vmatpush1.bf16.msra.mxu0 %v1002
    %1116 = vmatprep.subr.bf16.mxu0 %v999
    %1117 = vmatpush1.bf16.msra.mxu0 %v998
    %1118 = vmatprep.subr.bf16.mxu0 %v995
    %1119 = vmatpush1.bf16.msra.mxu0 %v994
    %1120 = vmatprep.subr.bf16.mxu0 %v991
    %1121 = vmatpush1.bf16.msra.mxu0 %v990
    %1122 = vmatprep.subr.bf16.mxu0 %v987
    %1123 = vmatpush1.bf16.msra.mxu0 %v986
    %1124 = vmatprep.subr.bf16.mxu0 %v983
    %1125 = vmatpush1.bf16.msra.mxu0 %v982
    %1126 = vmatprep.subr.bf16.mxu0 %v1043
    %1127 = vmatpush2.bf16.msra.mxu0 %v1042
    %1128 = vmatprep.subr.bf16.mxu0 %v1039
    %1129 = vmatpush2.bf16.msra.mxu0 %v1038
    %1130 = vmatprep.subr.bf16.mxu0 %v1035
    %1131 = vmatpush2.bf16.msra.mxu0 %v1034
    %1132 = vmatprep.subr.bf16.mxu0 %v1031
    %1133 = vmatpush2.bf16.msra.mxu0 %v1030
    %1134 = vmatprep.subr.bf16.mxu0 %v1027
    %1135 = vmatpush2.bf16.msra.mxu0 %v1026
    %1136 = vmatprep.subr.bf16.mxu0 %v1023
    %1137 = vmatpush2.bf16.msra.mxu0 %v1022
    %1138 = vmatprep.subr.bf16.mxu0 %v1019
    %1139 = vmatpush2.bf16.msra.mxu0 %v1018
    %1140 = vmatprep.subr.bf16.mxu0 %v1015
    %1141 = vmatpush2.bf16.msra.mxu0 %v1014
    %1142 = vmatprep.mubr.bf16.mxu0 %v787
    %1143 = vmatmul.mubr.bf16.gmra.mxu0 %v786
    %v1144 = vpop.f32.mrf.mxu0
    %v1145 = vadd.f32 %v766, %v1144
    %v1146 = vpop.f32.mrf.mxu0
    %v1147 = vadd.f32 %v770, %v1146
    %v1148 = vpop.f32.mrf.mxu0
    %v1149 = vpop.f32.mrf.mxu0
    %1150 = vdwg.mxu0
    %1151 = vmatprep.subr.bf16.mxu0 %v1013
    %1152 = vmatpush1.bf16.msra.mxu0 %v1012
    %1153 = vmatprep.subr.bf16.mxu0 %v1009
    %1154 = vmatpush1.bf16.msra.mxu0 %v1008
    %1155 = vmatprep.subr.bf16.mxu0 %v1005
    %1156 = vmatpush1.bf16.msra.mxu0 %v1004
    %1157 = vmatprep.subr.bf16.mxu0 %v1001
    %1158 = vmatpush1.bf16.msra.mxu0 %v1000
    %1159 = vmatprep.subr.bf16.mxu0 %v997
    %1160 = vmatpush1.bf16.msra.mxu0 %v996
    %1161 = vmatprep.subr.bf16.mxu0 %v993
    %1162 = vmatpush1.bf16.msra.mxu0 %v992
    %1163 = vmatprep.subr.bf16.mxu0 %v989
    %1164 = vmatpush1.bf16.msra.mxu0 %v988
    %1165 = vmatprep.subr.bf16.mxu0 %v985
    %1166 = vmatpush1.bf16.msra.mxu0 %v984
    %1167 = vmatprep.subr.bf16.mxu0 %v1045
    %1168 = vmatpush2.bf16.msra.mxu0 %v1044
    %1169 = vmatprep.subr.bf16.mxu0 %v1041
    %1170 = vmatpush2.bf16.msra.mxu0 %v1040
    %1171 = vmatprep.subr.bf16.mxu0 %v1037
    %1172 = vmatpush2.bf16.msra.mxu0 %v1036
    %1173 = vmatprep.subr.bf16.mxu0 %v1033
    %1174 = vmatpush2.bf16.msra.mxu0 %v1032
    %1175 = vmatprep.subr.bf16.mxu0 %v1029
    %1176 = vmatpush2.bf16.msra.mxu0 %v1028
    %1177 = vmatprep.subr.bf16.mxu0 %v1025
    %1178 = vmatpush2.bf16.msra.mxu0 %v1024
    %1179 = vmatprep.subr.bf16.mxu0 %v1021
    %1180 = vmatpush2.bf16.msra.mxu0 %v1020
    %1181 = vmatprep.subr.bf16.mxu0 %v1017
    %1182 = vmatpush2.bf16.msra.mxu0 %v1016
    %1183 = vmatprep.mubr.bf16.mxu0 %v787
    %1184 = vmatmul.mubr.bf16.gmra.mxu0 %v786
    %v1185 = vpop.f32.mrf.mxu0
    %v1186 = vadd.f32 %v774, %v1185
    %v1187 = vpop.f32.mrf.mxu0
    %v1188 = vadd.f32 %v778, %v1187
    %v1189 = vpop.f32.mrf.mxu0
    %v1190 = vpop.f32.mrf.mxu0
    %1191 = vdwg.mxu0
    %v1192 = vxor.u32 %v1145, 2147483648
    %v1193 = vmul.f32 %v1192, 1.442695
    %v1194 = vpow.pop %v1193
    %v1195 = vadd.f32 %v1194, 1.0
    %v1196 = vrcp.pop %v1195
    %v1197 = vmul.f32 1.0, %v1196
    %v1198 = vxor.u32 %v1147, 2147483648
    %v1199 = vmul.f32 %v1198, 1.442695
    %v1200 = vpow.pop %v1199
    %v1201 = vadd.f32 %v1200, 1.0
    %v1202 = vrcp.pop %v1201
    %v1203 = vmul.f32 1.0, %v1202
    %v1204 = vtanh.pop %v1186
    %v1205 = vxor.u32 %v1188, 2147483648
    %v1206 = vmul.f32 %v1205, 1.442695
    %v1207 = vpow.pop %v1206
    %v1208 = vadd.f32 %v1207, 1.0
    %v1209 = vrcp.pop %v1208
    %v1210 = vmul.f32 1.0, %v1209
    %s1211 = scalar_lea.vmem [#allocation6], 8
    %v1212 = vld [vmem:[%s1211] sm:$0xff]
    %v1213 = vmul.f32 %v1203, %v1212
    %v1214 = vmul.f32 %v1197, %v1204
    %v1215 = vadd.f32 %v1213, %v1214
    %v1216 = vtanh.pop %v1215
    %v1217 = vmul.f32 %v1210, %v1216
    %s1218 = scalar_lea.vmem [#allocation12], 8
    %1219 = vst [vmem:[%s1218] sm:$0xff] %v1217
    %s1220 = scalar_lea.vmem [#allocation14], 8
    %1221 = vst [vmem:[%s1220] sm:$0xff] %v1215
    %v1222 = vpack.c.bf16 %v1217, %v1217
    %1223 = vst [vmem:[#allocation2] sm:$0xf] %v1222
    %s1224 = scalar_lea.vmem [#allocation3], 16
    %v1225 = vld [vmem:[%s1224] sm:$0xff]
    %v1226 = vpack.c.bf16 %v1225, %v1225
    %1227 = vst [vmem:[#allocation2 + $0x4] sm:$0xf] %v1226
    %v1228 = vld [vmem:[#allocation2] sm:$0xff]
    %s1229 = scalar_lea.vmem [#allocation8], 1024
    %v1230 = vld [vmem:[%s1229] sm:$0xff]
    %v1231 = vld [vmem:[%s1229 + $0x8] sm:$0xff]
    %v1232 = vld [vmem:[%s1229 + $0x10] sm:$0xff]
    %v1233 = vld [vmem:[%s1229 + $0x18] sm:$0xff]
    %v1234 = vld [vmem:[%s1229 + $0x20] sm:$0xff]
    %v1235 = vld [vmem:[%s1229 + $0x28] sm:$0xff]
    %v1236 = vld [vmem:[%s1229 + $0x30] sm:$0xff]
    %v1237 = vld [vmem:[%s1229 + $0x38] sm:$0xff]
    %v1238 = vld [vmem:[%s1229 + $0x40] sm:$0xff]
    %v1239 = vld [vmem:[%s1229 + $0x48] sm:$0xff]
    %v1240 = vld [vmem:[%s1229 + $0x50] sm:$0xff]
    %v1241 = vld [vmem:[%s1229 + $0x58] sm:$0xff]
    %v1242 = vld [vmem:[%s1229 + $0x60] sm:$0xff]
    %v1243 = vld [vmem:[%s1229 + $0x68] sm:$0xff]
    %v1244 = vld [vmem:[%s1229 + $0x70] sm:$0xff]
    %v1245 = vld [vmem:[%s1229 + $0x78] sm:$0xff]
    %v1246 = vld [vmem:[%s1229 + $0x80] sm:$0xff]
    %v1247 = vld [vmem:[%s1229 + $0x88] sm:$0xff]
    %v1248 = vld [vmem:[%s1229 + $0x90] sm:$0xff]
    %v1249 = vld [vmem:[%s1229 + $0x98] sm:$0xff]
    %v1250 = vld [vmem:[%s1229 + $0xa0] sm:$0xff]
    %v1251 = vld [vmem:[%s1229 + $0xa8] sm:$0xff]
    %v1252 = vld [vmem:[%s1229 + $0xb0] sm:$0xff]
    %v1253 = vld [vmem:[%s1229 + $0xb8] sm:$0xff]
    %v1254 = vld [vmem:[%s1229 + $0xc0] sm:$0xff]
    %v1255 = vld [vmem:[%s1229 + $0xc8] sm:$0xff]
    %v1256 = vld [vmem:[%s1229 + $0xd0] sm:$0xff]
    %v1257 = vld [vmem:[%s1229 + $0xd8] sm:$0xff]
    %v1258 = vld [vmem:[%s1229 + $0xe0] sm:$0xff]
    %v1259 = vld [vmem:[%s1229 + $0xe8] sm:$0xff]
    %v1260 = vld [vmem:[%s1229 + $0xf0] sm:$0xff]
    %v1261 = vld [vmem:[%s1229 + $0xf8] sm:$0xff]
    %v1262 = vld [vmem:[%s1229 + $0x100] sm:$0xff]
    %v1263 = vld [vmem:[%s1229 + $0x108] sm:$0xff]
    %v1264 = vld [vmem:[%s1229 + $0x110] sm:$0xff]
    %v1265 = vld [vmem:[%s1229 + $0x118] sm:$0xff]
    %v1266 = vld [vmem:[%s1229 + $0x120] sm:$0xff]
    %v1267 = vld [vmem:[%s1229 + $0x128] sm:$0xff]
    %v1268 = vld [vmem:[%s1229 + $0x130] sm:$0xff]
    %v1269 = vld [vmem:[%s1229 + $0x138] sm:$0xff]
    %v1270 = vld [vmem:[%s1229 + $0x140] sm:$0xff]
    %v1271 = vld [vmem:[%s1229 + $0x148] sm:$0xff]
    %v1272 = vld [vmem:[%s1229 + $0x150] sm:$0xff]
    %v1273 = vld [vmem:[%s1229 + $0x158] sm:$0xff]
    %v1274 = vld [vmem:[%s1229 + $0x160] sm:$0xff]
    %v1275 = vld [vmem:[%s1229 + $0x168] sm:$0xff]
    %v1276 = vld [vmem:[%s1229 + $0x170] sm:$0xff]
    %v1277 = vld [vmem:[%s1229 + $0x178] sm:$0xff]
    %v1278 = vld [vmem:[%s1229 + $0x180] sm:$0xff]
    %v1279 = vld [vmem:[%s1229 + $0x188] sm:$0xff]
    %v1280 = vld [vmem:[%s1229 + $0x190] sm:$0xff]
    %v1281 = vld [vmem:[%s1229 + $0x198] sm:$0xff]
    %v1282 = vld [vmem:[%s1229 + $0x1a0] sm:$0xff]
    %v1283 = vld [vmem:[%s1229 + $0x1a8] sm:$0xff]
    %v1284 = vld [vmem:[%s1229 + $0x1b0] sm:$0xff]
    %v1285 = vld [vmem:[%s1229 + $0x1b8] sm:$0xff]
    %v1286 = vld [vmem:[%s1229 + $0x1c0] sm:$0xff]
    %v1287 = vld [vmem:[%s1229 + $0x1c8] sm:$0xff]
    %v1288 = vld [vmem:[%s1229 + $0x1d0] sm:$0xff]
    %v1289 = vld [vmem:[%s1229 + $0x1d8] sm:$0xff]
    %v1290 = vld [vmem:[%s1229 + $0x1e0] sm:$0xff]
    %v1291 = vld [vmem:[%s1229 + $0x1e8] sm:$0xff]
    %v1292 = vld [vmem:[%s1229 + $0x1f0] sm:$0xff]
    %v1293 = vld [vmem:[%s1229 + $0x1f8] sm:$0xff]
    %s1294 = scalar_lea.vmem [#allocation9], 8
    %v1295 = vld [vmem:[%s1294] sm:$0xf]
    %v1297 = vlaneseq
    %v1298 = vshrl.u32 %v1297, 7
    %v1299 = vsub.s32 0, %v1298
    %v1300 = vrot.slane %v1295, %v1299
    %v1301 = vlaneseq
    %v1302 = vshrl.u32 %v1301, 7
    %v1303 = vsub.s32 1, %v1302
    %v1304 = vrot.slane %v1295, %v1303
    %v1305 = vlaneseq
    %v1306 = vshrl.u32 %v1305, 7
    %v1307 = vsub.s32 2, %v1306
    %v1308 = vrot.slane %v1295, %v1307
    %v1309 = vlaneseq
    %v1310 = vshrl.u32 %v1309, 7
    %v1311 = vsub.s32 3, %v1310
    %v1312 = vrot.slane %v1295, %v1311
    %v1318 = vunpack.c.l.b16 %v1228
    %v1319 = vunpack.c.h.b16 %v1228
    %v1320 = vpack.c.b16 %v1318, %v1318
    %v1321 = vpack.c.b16 %v1319, %v1319
    %v1388 = vunpack.c.l.b16 %v1230
    %v1389 = vunpack.c.h.b16 %v1230
    %v1390 = vunpack.c.l.b16 %v1231
    %v1391 = vunpack.c.h.b16 %v1231
    %v1392 = vunpack.c.l.b16 %v1232
    %v1393 = vunpack.c.h.b16 %v1232
    %v1394 = vunpack.c.l.b16 %v1233
    %v1395 = vunpack.c.h.b16 %v1233
    %v1396 = vunpack.c.l.b16 %v1234
    %v1397 = vunpack.c.h.b16 %v1234
    %v1398 = vunpack.c.l.b16 %v1235
    %v1399 = vunpack.c.h.b16 %v1235
    %v1400 = vunpack.c.l.b16 %v1236
    %v1401 = vunpack.c.h.b16 %v1236
    %v1402 = vunpack.c.l.b16 %v1237
    %v1403 = vunpack.c.h.b16 %v1237
    %v1404 = vunpack.c.l.b16 %v1238
    %v1405 = vunpack.c.h.b16 %v1238
    %v1406 = vunpack.c.l.b16 %v1239
    %v1407 = vunpack.c.h.b16 %v1239
    %v1408 = vunpack.c.l.b16 %v1240
    %v1409 = vunpack.c.h.b16 %v1240
    %v1410 = vunpack.c.l.b16 %v1241
    %v1411 = vunpack.c.h.b16 %v1241
    %v1412 = vunpack.c.l.b16 %v1242
    %v1413 = vunpack.c.h.b16 %v1242
    %v1414 = vunpack.c.l.b16 %v1243
    %v1415 = vunpack.c.h.b16 %v1243
    %v1416 = vunpack.c.l.b16 %v1244
    %v1417 = vunpack.c.h.b16 %v1244
    %v1418 = vunpack.c.l.b16 %v1245
    %v1419 = vunpack.c.h.b16 %v1245
    %v1420 = vunpack.c.l.b16 %v1246
    %v1421 = vunpack.c.h.b16 %v1246
    %v1422 = vunpack.c.l.b16 %v1247
    %v1423 = vunpack.c.h.b16 %v1247
    %v1424 = vunpack.c.l.b16 %v1248
    %v1425 = vunpack.c.h.b16 %v1248
    %v1426 = vunpack.c.l.b16 %v1249
    %v1427 = vunpack.c.h.b16 %v1249
    %v1428 = vunpack.c.l.b16 %v1250
    %v1429 = vunpack.c.h.b16 %v1250
    %v1430 = vunpack.c.l.b16 %v1251
    %v1431 = vunpack.c.h.b16 %v1251
    %v1432 = vunpack.c.l.b16 %v1252
    %v1433 = vunpack.c.h.b16 %v1252
    %v1434 = vunpack.c.l.b16 %v1253
    %v1435 = vunpack.c.h.b16 %v1253
    %v1436 = vunpack.c.l.b16 %v1254
    %v1437 = vunpack.c.h.b16 %v1254
    %v1438 = vunpack.c.l.b16 %v1255
    %v1439 = vunpack.c.h.b16 %v1255
    %v1440 = vunpack.c.l.b16 %v1256
    %v1441 = vunpack.c.h.b16 %v1256
    %v1442 = vunpack.c.l.b16 %v1257
    %v1443 = vunpack.c.h.b16 %v1257
    %v1444 = vunpack.c.l.b16 %v1258
    %v1445 = vunpack.c.h.b16 %v1258
    %v1446 = vunpack.c.l.b16 %v1259
    %v1447 = vunpack.c.h.b16 %v1259
    %v1448 = vunpack.c.l.b16 %v1260
    %v1449 = vunpack.c.h.b16 %v1260
    %v1450 = vunpack.c.l.b16 %v1261
    %v1451 = vunpack.c.h.b16 %v1261
    %v1452 = vunpack.c.l.b16 %v1262
    %v1453 = vunpack.c.h.b16 %v1262
    %v1454 = vunpack.c.l.b16 %v1263
    %v1455 = vunpack.c.h.b16 %v1263
    %v1456 = vunpack.c.l.b16 %v1264
    %v1457 = vunpack.c.h.b16 %v1264
    %v1458 = vunpack.c.l.b16 %v1265
    %v1459 = vunpack.c.h.b16 %v1265
    %v1460 = vunpack.c.l.b16 %v1266
    %v1461 = vunpack.c.h.b16 %v1266
    %v1462 = vunpack.c.l.b16 %v1267
    %v1463 = vunpack.c.h.b16 %v1267
    %v1464 = vunpack.c.l.b16 %v1268
    %v1465 = vunpack.c.h.b16 %v1268
    %v1466 = vunpack.c.l.b16 %v1269
    %v1467 = vunpack.c.h.b16 %v1269
    %v1468 = vunpack.c.l.b16 %v1270
    %v1469 = vunpack.c.h.b16 %v1270
    %v1470 = vunpack.c.l.b16 %v1271
    %v1471 = vunpack.c.h.b16 %v1271
    %v1472 = vunpack.c.l.b16 %v1272
    %v1473 = vunpack.c.h.b16 %v1272
    %v1474 = vunpack.c.l.b16 %v1273
    %v1475 = vunpack.c.h.b16 %v1273
    %v1476 = vunpack.c.l.b16 %v1274
    %v1477 = vunpack.c.h.b16 %v1274
    %v1478 = vunpack.c.l.b16 %v1275
    %v1479 = vunpack.c.h.b16 %v1275
    %v1480 = vunpack.c.l.b16 %v1276
    %v1481 = vunpack.c.h.b16 %v1276
    %v1482 = vunpack.c.l.b16 %v1277
    %v1483 = vunpack.c.h.b16 %v1277
    %v1484 = vunpack.c.l.b16 %v1278
    %v1485 = vunpack.c.h.b16 %v1278
    %v1486 = vunpack.c.l.b16 %v1279
    %v1487 = vunpack.c.h.b16 %v1279
    %v1488 = vunpack.c.l.b16 %v1280
    %v1489 = vunpack.c.h.b16 %v1280
    %v1490 = vunpack.c.l.b16 %v1281
    %v1491 = vunpack.c.h.b16 %v1281
    %v1492 = vunpack.c.l.b16 %v1282
    %v1493 = vunpack.c.h.b16 %v1282
    %v1494 = vunpack.c.l.b16 %v1283
    %v1495 = vunpack.c.h.b16 %v1283
    %v1496 = vunpack.c.l.b16 %v1284
    %v1497 = vunpack.c.h.b16 %v1284
    %v1498 = vunpack.c.l.b16 %v1285
    %v1499 = vunpack.c.h.b16 %v1285
    %v1500 = vunpack.c.l.b16 %v1286
    %v1501 = vunpack.c.h.b16 %v1286
    %v1502 = vunpack.c.l.b16 %v1287
    %v1503 = vunpack.c.h.b16 %v1287
    %v1504 = vunpack.c.l.b16 %v1288
    %v1505 = vunpack.c.h.b16 %v1288
    %v1506 = vunpack.c.l.b16 %v1289
    %v1507 = vunpack.c.h.b16 %v1289
    %v1508 = vunpack.c.l.b16 %v1290
    %v1509 = vunpack.c.h.b16 %v1290
    %v1510 = vunpack.c.l.b16 %v1291
    %v1511 = vunpack.c.h.b16 %v1291
    %v1512 = vunpack.c.l.b16 %v1292
    %v1513 = vunpack.c.h.b16 %v1292
    %v1514 = vunpack.c.l.b16 %v1293
    %v1515 = vunpack.c.h.b16 %v1293
    %v1516 = vpack.c.b16 %v1392, %v1388
    %v1517 = vpack.c.b16 %v1393, %v1389
    %v1518 = vpack.c.b16 %v1394, %v1390
    %v1519 = vpack.c.b16 %v1395, %v1391
    %v1520 = vpack.c.b16 %v1400, %v1396
    %v1521 = vpack.c.b16 %v1401, %v1397
    %v1522 = vpack.c.b16 %v1402, %v1398
    %v1523 = vpack.c.b16 %v1403, %v1399
    %v1524 = vpack.c.b16 %v1408, %v1404
    %v1525 = vpack.c.b16 %v1409, %v1405
    %v1526 = vpack.c.b16 %v1410, %v1406
    %v1527 = vpack.c.b16 %v1411, %v1407
    %v1528 = vpack.c.b16 %v1416, %v1412
    %v1529 = vpack.c.b16 %v1417, %v1413
    %v1530 = vpack.c.b16 %v1418, %v1414
    %v1531 = vpack.c.b16 %v1419, %v1415
    %v1532 = vpack.c.b16 %v1424, %v1420
    %v1533 = vpack.c.b16 %v1425, %v1421
    %v1534 = vpack.c.b16 %v1426, %v1422
    %v1535 = vpack.c.b16 %v1427, %v1423
    %v1536 = vpack.c.b16 %v1432, %v1428
    %v1537 = vpack.c.b16 %v1433, %v1429
    %v1538 = vpack.c.b16 %v1434, %v1430
    %v1539 = vpack.c.b16 %v1435, %v1431
    %v1540 = vpack.c.b16 %v1440, %v1436
    %v1541 = vpack.c.b16 %v1441, %v1437
    %v1542 = vpack.c.b16 %v1442, %v1438
    %v1543 = vpack.c.b16 %v1443, %v1439
    %v1544 = vpack.c.b16 %v1448, %v1444
    %v1545 = vpack.c.b16 %v1449, %v1445
    %v1546 = vpack.c.b16 %v1450, %v1446
    %v1547 = vpack.c.b16 %v1451, %v1447
    %v1548 = vpack.c.b16 %v1456, %v1452
    %v1549 = vpack.c.b16 %v1457, %v1453
    %v1550 = vpack.c.b16 %v1458, %v1454
    %v1551 = vpack.c.b16 %v1459, %v1455
    %v1552 = vpack.c.b16 %v1464, %v1460
    %v1553 = vpack.c.b16 %v1465, %v1461
    %v1554 = vpack.c.b16 %v1466, %v1462
    %v1555 = vpack.c.b16 %v1467, %v1463
    %v1556 = vpack.c.b16 %v1472, %v1468
    %v1557 = vpack.c.b16 %v1473, %v1469
    %v1558 = vpack.c.b16 %v1474, %v1470
    %v1559 = vpack.c.b16 %v1475, %v1471
    %v1560 = vpack.c.b16 %v1480, %v1476
    %v1561 = vpack.c.b16 %v1481, %v1477
    %v1562 = vpack.c.b16 %v1482, %v1478
    %v1563 = vpack.c.b16 %v1483, %v1479
    %v1564 = vpack.c.b16 %v1488, %v1484
    %v1565 = vpack.c.b16 %v1489, %v1485
    %v1566 = vpack.c.b16 %v1490, %v1486
    %v1567 = vpack.c.b16 %v1491, %v1487
    %v1568 = vpack.c.b16 %v1496, %v1492
    %v1569 = vpack.c.b16 %v1497, %v1493
    %v1570 = vpack.c.b16 %v1498, %v1494
    %v1571 = vpack.c.b16 %v1499, %v1495
    %v1572 = vpack.c.b16 %v1504, %v1500
    %v1573 = vpack.c.b16 %v1505, %v1501
    %v1574 = vpack.c.b16 %v1506, %v1502
    %v1575 = vpack.c.b16 %v1507, %v1503
    %v1576 = vpack.c.b16 %v1512, %v1508
    %v1577 = vpack.c.b16 %v1513, %v1509
    %v1578 = vpack.c.b16 %v1514, %v1510
    %v1579 = vpack.c.b16 %v1515, %v1511
    %1644 = vmatprep.subr.bf16.mxu0 %v1545
    %1645 = vmatpush1.bf16.msra.mxu0 %v1544
    %1646 = vmatprep.subr.bf16.mxu0 %v1541
    %1647 = vmatpush1.bf16.msra.mxu0 %v1540
    %1648 = vmatprep.subr.bf16.mxu0 %v1537
    %1649 = vmatpush1.bf16.msra.mxu0 %v1536
    %1650 = vmatprep.subr.bf16.mxu0 %v1533
    %1651 = vmatpush1.bf16.msra.mxu0 %v1532
    %1652 = vmatprep.subr.bf16.mxu0 %v1529
    %1653 = vmatpush1.bf16.msra.mxu0 %v1528
    %1654 = vmatprep.subr.bf16.mxu0 %v1525
    %1655 = vmatpush1.bf16.msra.mxu0 %v1524
    %1656 = vmatprep.subr.bf16.mxu0 %v1521
    %1657 = vmatpush1.bf16.msra.mxu0 %v1520
    %1658 = vmatprep.subr.bf16.mxu0 %v1517
    %1659 = vmatpush1.bf16.msra.mxu0 %v1516
    %1660 = vmatprep.subr.bf16.mxu0 %v1577
    %1661 = vmatpush2.bf16.msra.mxu0 %v1576
    %1662 = vmatprep.subr.bf16.mxu0 %v1573
    %1663 = vmatpush2.bf16.msra.mxu0 %v1572
    %1664 = vmatprep.subr.bf16.mxu0 %v1569
    %1665 = vmatpush2.bf16.msra.mxu0 %v1568
    %1666 = vmatprep.subr.bf16.mxu0 %v1565
    %1667 = vmatpush2.bf16.msra.mxu0 %v1564
    %1668 = vmatprep.subr.bf16.mxu0 %v1561
    %1669 = vmatpush2.bf16.msra.mxu0 %v1560
    %1670 = vmatprep.subr.bf16.mxu0 %v1557
    %1671 = vmatpush2.bf16.msra.mxu0 %v1556
    %1672 = vmatprep.subr.bf16.mxu0 %v1553
    %1673 = vmatpush2.bf16.msra.mxu0 %v1552
    %1674 = vmatprep.subr.bf16.mxu0 %v1549
    %1675 = vmatpush2.bf16.msra.mxu0 %v1548
    %1676 = vmatprep.mubr.bf16.mxu0 %v1321
    %1677 = vmatmul.mubr.bf16.gmra.mxu0 %v1320
    %v1678 = vpop.f32.mrf.mxu0
    %v1679 = vadd.f32 %v1300, %v1678
    %v1680 = vpop.f32.mrf.mxu0
    %v1681 = vadd.f32 %v1304, %v1680
    %v1682 = vpop.f32.mrf.mxu0
    %v1683 = vpop.f32.mrf.mxu0
    %1684 = vdwg.mxu0
    %1685 = vmatprep.subr.bf16.mxu0 %v1547
    %1686 = vmatpush1.bf16.msra.mxu0 %v1546
    %1687 = vmatprep.subr.bf16.mxu0 %v1543
    %1688 = vmatpush1.bf16.msra.mxu0 %v1542
    %1689 = vmatprep.subr.bf16.mxu0 %v1539
    %1690 = vmatpush1.bf16.msra.mxu0 %v1538
    %1691 = vmatprep.subr.bf16.mxu0 %v1535
    %1692 = vmatpush1.bf16.msra.mxu0 %v1534
    %1693 = vmatprep.subr.bf16.mxu0 %v1531
    %1694 = vmatpush1.bf16.msra.mxu0 %v1530
    %1695 = vmatprep.subr.bf16.mxu0 %v1527
    %1696 = vmatpush1.bf16.msra.mxu0 %v1526
    %1697 = vmatprep.subr.bf16.mxu0 %v1523
    %1698 = vmatpush1.bf16.msra.mxu0 %v1522
    %1699 = vmatprep.subr.bf16.mxu0 %v1519
    %1700 = vmatpush1.bf16.msra.mxu0 %v1518
    %1701 = vmatprep.subr.bf16.mxu0 %v1579
    %1702 = vmatpush2.bf16.msra.mxu0 %v1578
    %1703 = vmatprep.subr.bf16.mxu0 %v1575
    %1704 = vmatpush2.bf16.msra.mxu0 %v1574
    %1705 = vmatprep.subr.bf16.mxu0 %v1571
    %1706 = vmatpush2.bf16.msra.mxu0 %v1570
    %1707 = vmatprep.subr.bf16.mxu0 %v1567
    %1708 = vmatpush2.bf16.msra.mxu0 %v1566
    %1709 = vmatprep.subr.bf16.mxu0 %v1563
    %1710 = vmatpush2.bf16.msra.mxu0 %v1562
    %1711 = vmatprep.subr.bf16.mxu0 %v1559
    %1712 = vmatpush2.bf16.msra.mxu0 %v1558
    %1713 = vmatprep.subr.bf16.mxu0 %v1555
    %1714 = vmatpush2.bf16.msra.mxu0 %v1554
    %1715 = vmatprep.subr.bf16.mxu0 %v1551
    %1716 = vmatpush2.bf16.msra.mxu0 %v1550
    %1717 = vmatprep.mubr.bf16.mxu0 %v1321
    %1718 = vmatmul.mubr.bf16.gmra.mxu0 %v1320
    %v1719 = vpop.f32.mrf.mxu0
    %v1720 = vadd.f32 %v1308, %v1719
    %v1721 = vpop.f32.mrf.mxu0
    %v1722 = vadd.f32 %v1312, %v1721
    %v1723 = vpop.f32.mrf.mxu0
    %v1724 = vpop.f32.mrf.mxu0
    %1725 = vdwg.mxu0
    %v1726 = vxor.u32 %v1679, 2147483648
    %v1727 = vmul.f32 %v1726, 1.442695
    %v1728 = vpow.pop %v1727
    %v1729 = vadd.f32 %v1728, 1.0
    %v1730 = vrcp.pop %v1729
    %v1731 = vmul.f32 1.0, %v1730
    %v1732 = vxor.u32 %v1681, 2147483648
    %v1733 = vmul.f32 %v1732, 1.442695
    %v1734 = vpow.pop %v1733
    %v1735 = vadd.f32 %v1734, 1.0
    %v1736 = vrcp.pop %v1735
    %v1737 = vmul.f32 1.0, %v1736
    %v1738 = vtanh.pop %v1720
    %v1739 = vxor.u32 %v1722, 2147483648
    %v1740 = vmul.f32 %v1739, 1.442695
    %v1741 = vpow.pop %v1740
    %v1742 = vadd.f32 %v1741, 1.0
    %v1743 = vrcp.pop %v1742
    %v1744 = vmul.f32 1.0, %v1743
    %s1745 = scalar_lea.vmem [#allocation6], 16
    %v1746 = vld [vmem:[%s1745] sm:$0xff]
    %v1747 = vmul.f32 %v1737, %v1746
    %v1748 = vmul.f32 %v1731, %v1738
    %v1749 = vadd.f32 %v1747, %v1748
    %v1750 = vtanh.pop %v1749
    %v1751 = vmul.f32 %v1744, %v1750
    %s1752 = scalar_lea.vmem [#allocation12], 16
    %1753 = vst [vmem:[%s1752] sm:$0xff] %v1751
    %s1754 = scalar_lea.vmem [#allocation14], 16
    %1755 = vst [vmem:[%s1754] sm:$0xff] %v1749
    %v1756 = vpack.c.bf16 %v1751, %v1751
    %v1757 = vld [vmem:[%s6] sm:$0xf]
    %v1758 = vld [vmem:[%s6 + $0x4] sm:$0xf]
    %v1759 = vld [vmem:[%s6 + $0x8] sm:$0xf]
    %v1760 = vld [vmem:[%s6 + $0xc] sm:$0xf]
    %v1761 = vld [vmem:[%s6 + $0x10] sm:$0xf]
    %v1762 = vld [vmem:[%s6 + $0x14] sm:$0xf]
    %v1763 = vld [vmem:[%s6 + $0x18] sm:$0xf]
    %v1764 = vld [vmem:[%s6 + $0x1c] sm:$0xf]
    %v1765 = vld [vmem:[%s6 + $0x20] sm:$0xf]
    %v1766 = vld [vmem:[%s6 + $0x24] sm:$0xf]
    %v1767 = vld [vmem:[%s6 + $0x28] sm:$0xf]
    %v1768 = vld [vmem:[%s6 + $0x2c] sm:$0xf]
    %v1769 = vld [vmem:[%s6 + $0x30] sm:$0xf]
    %v1770 = vld [vmem:[%s6 + $0x34] sm:$0xf]
    %v1771 = vld [vmem:[%s6 + $0x38] sm:$0xf]
    %v1772 = vld [vmem:[%s6 + $0x3c] sm:$0xf]
    %v1773 = vld [vmem:[%s7] sm:$0x1]
    %v1775 = vlaneseq
    %v1776 = vshrl.u32 %v1775, 7
    %v1777 = vsub.s32 0, %v1776
    %v1778 = vrot.slane %v1773, %v1777
    %v1796 = vunpack.c.l.b16 %v1757
    %v1797 = vunpack.c.l.b16 %v1758
    %v1798 = vunpack.c.l.b16 %v1759
    %v1799 = vunpack.c.l.b16 %v1760
    %v1800 = vunpack.c.l.b16 %v1761
    %v1801 = vunpack.c.l.b16 %v1762
    %v1802 = vunpack.c.l.b16 %v1763
    %v1803 = vunpack.c.l.b16 %v1764
    %v1804 = vunpack.c.l.b16 %v1765
    %v1805 = vunpack.c.l.b16 %v1766
    %v1806 = vunpack.c.l.b16 %v1767
    %v1807 = vunpack.c.l.b16 %v1768
    %v1808 = vunpack.c.l.b16 %v1769
    %v1809 = vunpack.c.l.b16 %v1770
    %v1810 = vunpack.c.l.b16 %v1771
    %v1811 = vunpack.c.l.b16 %v1772
    %v1812 = vpack.c.b16 %v1797, %v1796
    %v1813 = vpack.c.b16 %v1799, %v1798
    %v1814 = vpack.c.b16 %v1801, %v1800
    %v1815 = vpack.c.b16 %v1803, %v1802
    %v1816 = vpack.c.b16 %v1805, %v1804
    %v1817 = vpack.c.b16 %v1807, %v1806
    %v1818 = vpack.c.b16 %v1809, %v1808
    %v1819 = vpack.c.b16 %v1811, %v1810
    %1828 = vmatprep.subr.bf16.mxu0 0
    %1829 = vmatpush1.bf16.msra.mxu0 %v1819
    %1830 = vmatprep.subr.bf16.mxu0 0
    %1831 = vmatpush1.bf16.msra.mxu0 %v1818
    %1832 = vmatprep.subr.bf16.mxu0 0
    %1833 = vmatpush1.bf16.msra.mxu0 %v1817
    %1834 = vmatprep.subr.bf16.mxu0 0
    %1835 = vmatpush1.bf16.msra.mxu0 %v1816
    %1836 = vmatprep.subr.bf16.mxu0 0
    %1837 = vmatpush1.bf16.msra.mxu0 %v1815
    %1838 = vmatprep.subr.bf16.mxu0 0
    %1839 = vmatpush1.bf16.msra.mxu0 %v1814
    %1840 = vmatprep.subr.bf16.mxu0 0
    %1841 = vmatpush1.bf16.msra.mxu0 %v1813
    %1842 = vmatprep.subr.bf16.mxu0 0
    %1843 = vmatpush1.bf16.msra.mxu0 %v1812
    %1844 = vmatprep.subr.bf16.mxu0 0
    %1845 = vmatpush2.bf16.msra.mxu0 0
    %1846 = vmatprep.subr.bf16.mxu0 0
    %1847 = vmatpush2.bf16.msra.mxu0 0
    %1848 = vmatprep.subr.bf16.mxu0 0
    %1849 = vmatpush2.bf16.msra.mxu0 0
    %1850 = vmatprep.subr.bf16.mxu0 0
    %1851 = vmatpush2.bf16.msra.mxu0 0
    %1852 = vmatprep.subr.bf16.mxu0 0
    %1853 = vmatpush2.bf16.msra.mxu0 0
    %1854 = vmatprep.subr.bf16.mxu0 0
    %1855 = vmatpush2.bf16.msra.mxu0 0
    %1856 = vmatprep.subr.bf16.mxu0 0
    %1857 = vmatpush2.bf16.msra.mxu0 0
    %1858 = vmatprep.subr.bf16.mxu0 0
    %1859 = vmatpush2.bf16.msra.mxu0 0
    %1860 = vmatprep.mubr.bf16.mxu0 0
    %1861 = vmatmul.mubr.bf16.gmra.mxu0 %v1756
    %v1862 = vpop.f32.mrf.mxu0
    %v1863 = vadd.f32 %v1778, %v1862
    %v1864 = vpop.f32.mrf.mxu0
    %v1865 = vpop.f32.mrf.mxu0
    %v1866 = vpop.f32.mrf.mxu0
    %1867 = vdwg.mxu0
    %1868 = vst [vmem:[#allocation11] sm:$0xff] %v1863
    // Predicated region
    $region50: #{tpu_custom_call.1} parent=1 // pred_check
      _
    $region51: #{tpu_custom_call.1} parent=1 // pred_check_branch
      %1870 = sbr.rel (0) target = $region53
    $region52: #{tpu_custom_call.1} parent=1 // pred_region
      %s1872 = ssub.s32 128, 128
      %1873 = vsyncadd [#allocation5], %s1872
      %s1875 = sshll.u32 [#allocation11], 4
      %s1876 = int_to_ptr.vmem [resolvable:$true] %s1875
      %1878 = dma.vmem_to_hbm [thread:$0]  %s1876, 128, %s8, [#allocation5]
    $region53: #{tpu_custom_call.1} parent=1 // pred_fallthru
      _
    // Predicated region
    $region54: #{tpu_custom_call.1} parent=1 // pred_check
      _
    $region55: #{tpu_custom_call.1} parent=1 // pred_check_branch
      %1880 = sbr.rel (0) target = $region57
    $region56: #{tpu_custom_call.1} parent=1 // pred_region
      %s1882 = ssub.s32 384, 384
      %1883 = vsyncadd [#allocation13], %s1882
      %s1884 = sshll.u32 [#allocation12], 4
      %s1885 = int_to_ptr.vmem [resolvable:$true] %s1884
      %1890 = dma.vmem_to_hbm [thread:$0]  %s1885, 384, %s9, [#allocation13], 128, 128, 8
    $region57: #{tpu_custom_call.1} parent=1 // pred_fallthru
      _
    // Predicated region
    $region58: #{tpu_custom_call.1} parent=1 // pred_check
      _
    $region59: #{tpu_custom_call.1} parent=1 // pred_check_branch
      %1892 = sbr.rel (0) target = $region61
    $region60: #{tpu_custom_call.1} parent=1 // pred_region
      %s1894 = ssub.s32 384, 384
      %1895 = vsyncadd [#allocation13], %s1894
      %s1896 = sshll.u32 [#allocation14], 4
      %s1897 = int_to_ptr.vmem [resolvable:$true] %s1896
      %1902 = dma.vmem_to_hbm [thread:$0]  %s1897, 384, %s10, [#allocation13], 128, 128, 8
    $region61: #{tpu_custom_call.1} parent=1 // pred_fallthru
      _
    // Predicated region
    $region62: #{tpu_custom_call.1} parent=1 // pred_check
      _
    $region63: #{tpu_custom_call.1} parent=1 // pred_check_branch
      %1904 = sbr.rel (0) target = $region65
    $region64: #{tpu_custom_call.1} parent=1 // pred_region
      %1905 = dma.done [#allocation5], 128
    $region65: #{tpu_custom_call.1} parent=1 // pred_fallthru
      _
    // Predicated region
    $region66: #{tpu_custom_call.1} parent=1 // pred_check
      _
    $region67: #{tpu_custom_call.1} parent=1 // pred_check_branch
      %1907 = sbr.rel (0) target = $region69
    $region68: #{tpu_custom_call.1} parent=1 // pred_region
      %1908 = dma.done [#allocation13], 384
    $region69: #{tpu_custom_call.1} parent=1 // pred_fallthru
      _
    // Predicated region
    $region70: #{tpu_custom_call.1} parent=1 // pred_check
      _
    $region71: #{tpu_custom_call.1} parent=1 // pred_check_branch
      %1910 = sbr.rel (0) target = $region73
    $region72: #{tpu_custom_call.1} parent=1 // pred_region
      %1911 = dma.done [#allocation13], 384
    $region73: #{tpu_custom_call.1} parent=1 // pred_fallthru
      _
    %1912 = vsyncpa [#allocation4], 1
    %1913 = vsyncpa [#allocation7], 1
    %1914 = vsyncpa [#allocation10], 1
    %1915 = vsyncpa [#allocation5], 1
    %1916 = vsyncpa [#allocation13], 1

</llo_original>
